<compile_context>
chip_gen: v5e
topology: v5e:2x2
jax: 0.10.0
libtpu: 0.0.40
codegen_flags: <defaults>
</compile_context>

<pallas_src>
import functools

import jax
import jax.numpy as jnp
from jax import lax
from jax.experimental import pallas as pl
from jax.experimental.pallas import tpu as pltpu


def _round_up(x, m):
    return (x + m - 1) // m * m


# ---------------------------------------------------------------------------
# Fused kernel: input projection + LSTM recurrence (once per time chunk) +
# vocab-tiled decoder.  Gate order (i, f, g, o) matches torch.nn.LSTM.
# ---------------------------------------------------------------------------
def _lstm_lm_kernel(emb_ref, wih_ref, whh_ref, b_ref, wdec_ref, bdec_ref,
                    h0_ref, c0_ref,
                    out_ref, hf_ref, cf_ref,
                    h_scr, c_scr, gx_scr, hall_scr,
                    *, t_total, unroll):
    chunk = pl.program_id(1)

    tc, tb, e_dim = emb_ref.shape          # emb block is time-major (tc, tb, E)
    h_dim = h_scr.shape[-1]                # padded hidden size (multiple of 128)
    g_dim = 4 * h_dim
    tv = wdec_ref.shape[-1]                # vocab tile width

    # ---- Input projection + serial recurrence: only once per (batch, chunk);
    #      all vocab tiles (program_id(2) > 0) reuse hall_scr / h_scr / c_scr. --
    @pl.when(pl.program_id(2) == 0)
    def _recurrence():
        @pl.when(chunk == 0)
        def _():
            h_scr[...] = h0_ref[...]
            c_scr[...] = c0_ref[...]

        if t_total % tc != 0:
            # Ragged last chunk: zero stale tail rows of hall so the decoder
            # matmul never consumes garbage (OOB output rows are discarded).
            @pl.when(chunk == pl.num_programs(1) - 1)
            def _():
                hall_scr[...] = jnp.zeros_like(hall_scr)

        # 1) Input projection for the whole chunk: one big bf16 MXU matmul.
        emb2d = emb_ref[...].reshape(tc * tb, e_dim).astype(jnp.bfloat16)
        gx = jnp.dot(emb2d, wih_ref[...], preferred_element_type=jnp.float32)
        gx = gx + b_ref[...]                                  # fused b_ih + b_hh (f32)
        gx_scr[...] = gx.reshape(tc, tb, g_dim)               # time-major

        whh = whh_ref[...]                                    # bf16, hoisted out of loop

        # 2) Serial recurrence: only h @ W_hh + elementwise remains per step.
        def step(t, carry):
            h, c = carry
            g_x = gx_scr[t]                                   # (tb, 4H) plain offset load
            gates = g_x + jnp.dot(h.astype(jnp.bfloat16), whh,
                                  preferred_element_type=jnp.float32)
            # Lane-aligned per-gate activations (half the EUP work of where(tanh, sigmoid)).
            i_g = jax.nn.sigmoid(gates[:, 0:h_dim])
            f_g = jax.nn.sigmoid(gates[:, h_dim:2 * h_dim])
            g_g = jnp.tanh(gates[:, 2 * h_dim:3 * h_dim])
            o_g = jax.nn.sigmoid(gates[:, 3 * h_dim:])
            c_new = f_g * c + i_g * g_g
            h_new = o_g * jnp.tanh(c_new)
            # Single per-step store (batch-first so the decoder needs no transpose).
            hall_scr[:, pl.ds(t, 1), :] = h_new.reshape(tb, 1, h_dim)
            return h_new, c_new

        carry0 = (h_scr[...], c_scr[...])
        if t_total % tc == 0:
            h_fin, c_fin = lax.fori_loop(0, tc, step, carry0, unroll=unroll)
        else:
            # TODO(synk): dynamic trip count -> no unroll on the ragged last chunk.
            n_steps = jnp.minimum(tc, t_total - chunk * tc)
            h_fin, c_fin = lax.fori_loop(0, n_steps, step, carry0)

        # Persist carry across chunks.
        h_scr[...] = h_fin
        c_scr[...] = c_fin

    # Final state (written every grid step from the carry; last chunk wins).
    hf_ref[...] = h_scr[...]
    cf_ref[...] = c_scr[...]

    # ---- 3) Decoder for this vocab tile: one bf16 MXU matmul, lane-dense
    #         (tb, tc, tv) write straight to the (B, T, V) logits. ------------
    hs = hall_scr[...].reshape(tb * tc, h_dim).astype(jnp.bfloat16)
    logits = jnp.dot(hs, wdec_ref[...], preferred_element_type=jnp.float32)
    logits = logits + bdec_ref[...]
    out_ref[...] = logits.reshape(tb, tc, tv)


def lstm_lm_forward(emb_tm, wih_t, whh_t, bias, wdec_t, bdec, h0, c0,
                    *, time_chunk=128, vocab_tile=512, batch_block=None):
    """emb_tm: (T, B, E) f32 time-major embedded tokens (B multiple of 8, E/H/V
    multiples of 128).  Returns (logits (B, T, V), h_n (B, H), c_n (B, H))."""
    T, B, E = emb_tm.shape
    H = h0.shape[-1]
    G = 4 * H
    V = wdec_t.shape[-1]
    assert E % 128 == 0 and H % 128 == 0 and V % 128 == 0 and B % 8 == 0

    if batch_block is None:
        tb = B                                  # v5e/v6e: maximize matmul M per step
    else:                                       # v7x: split batch across the 2 TCs
        tb = min(B, max(8, (batch_block // 8) * 8))
    tc = T if T <= time_chunk else max(8, (time_chunk // 8) * 8)
    tv = V if V <= vocab_tile else max(128, (vocab_tile // 128) * 128)

    n_b = pl.cdiv(B, tb)
    n_c = pl.cdiv(T, tc)
    n_v = pl.cdiv(V, tv)

    kernel = functools.partial(_lstm_lm_kernel, t_total=T, unroll=min(8, tc))

    out, h_n, c_n = pl.pallas_call(
        kernel,
        out_shape=(jax.ShapeDtypeStruct((B, T, V), jnp.float32),
                   jax.ShapeDtypeStruct((B, H), jnp.float32),
                   jax.ShapeDtypeStruct((B, H), jnp.float32)),
        grid_spec=pltpu.PrefetchScalarGridSpec(
            num_scalar_prefetch=0,
            grid=(n_b, n_c, n_v),
            in_specs=[
                pl.BlockSpec((tc, tb, E), lambda b, c, v: (c, b, 0)),   # emb (time-major)
                pl.BlockSpec((E, G), lambda b, c, v: (0, 0)),           # W_ih^T (bf16)
                pl.BlockSpec((H, G), lambda b, c, v: (0, 0)),           # W_hh^T (bf16)
                pl.BlockSpec((1, G), lambda b, c, v: (0, 0)),           # b_ih + b_hh (f32)
                pl.BlockSpec((H, tv), lambda b, c, v: (0, v)),          # decoder W^T tile (bf16)
                pl.BlockSpec((1, tv), lambda b, c, v: (0, v)),          # decoder bias tile
                pl.BlockSpec((tb, H), lambda b, c, v: (b, 0)),          # h0
                pl.BlockSpec((tb, H), lambda b, c, v: (b, 0)),          # c0
            ],
            out_specs=[
                pl.BlockSpec((tb, tc, tv), lambda b, c, v: (b, c, v)),  # logits
                pl.BlockSpec((tb, H), lambda b, c, v: (b, 0)),          # h_n
                pl.BlockSpec((tb, H), lambda b, c, v: (b, 0)),          # c_n
            ],
            scratch_shapes=[
                pltpu.VMEM((tb, H), jnp.float32),        # h carry across chunks
                pltpu.VMEM((tb, H), jnp.float32),        # c carry across chunks
                pltpu.VMEM((tc, tb, G), jnp.float32),    # time-major input-proj gates
                pltpu.VMEM((tb, tc, H), jnp.float32),    # per-chunk hidden states
            ]),
        compiler_params=pltpu.CompilerParams(
            dimension_semantics=("parallel", "arbitrary", "arbitrary"),
            vmem_limit_bytes=64 * 1024 * 1024),
    )(emb_tm, wih_t, whh_t, bias, wdec_t, bdec, h0, c0)
    return out, h_n, c_n


# ---------------------------------------------------------------------------
# LangModel wrapper (eval mode)
# ---------------------------------------------------------------------------
class PallasLangModel:
    def __init__(self, ntokens, emb_size=100, rnn_size=100, key=None):
        if key is None:
            key = jax.random.PRNGKey(0)
        self.ntokens = ntokens
        self.emb_size = emb_size
        self.rnn_size = rnn_size
        H, E, V = rnn_size, emb_size, ntokens
        ks = jax.random.split(key, 7)
        s_e = 0.1
        s_h = 1.0 / float(rnn_size) ** 0.5
        # nn.Embedding weight (V, E)
        self.emb_table = s_e * jax.random.normal(ks[0], (V, E), jnp.float32)
        # nn.LSTM params (single layer, unidirectional), gate order i, f, g, o
        self.w_ih = s_h * jax.random.normal(ks[1], (4 * H, E), jnp.float32)
        self.w_hh = s_h * jax.random.normal(ks[2], (4 * H, H), jnp.float32)
        self.b_ih = s_h * jax.random.normal(ks[3], (4 * H,), jnp.float32)
        self.b_hh = s_h * jax.random.normal(ks[4], (4 * H,), jnp.float32)
        # nn.Linear(rnn_size, ntokens)
        self.dec_w = s_h * jax.random.normal(ks[5], (V, H), jnp.float32)
        self.dec_b = s_h * jax.random.normal(ks[6], (V,), jnp.float32)

        # -------- packed, padded, bf16 kernel operands (built once) ---------
        Hp = _round_up(H, 128)
        Ep = _round_up(E, 128)
        Vp = _round_up(V, 128)
        self.H_pad, self.E_pad, self.V_pad = Hp, Ep, Vp

        def pad_gates(w, in_dim, in_pad):
            # (4H, in) -> (4, H, in) -> pad -> (4*Hp, in_pad); keeps gate blocks
            # at offsets k*Hp so the kernel's lane-aligned slices line up.
            w4 = w.reshape(4, H, in_dim)
            w4 = jnp.pad(w4, ((0, 0), (0, Hp - H), (0, in_pad - in_dim)))
            return w4.reshape(4 * Hp, in_pad)

        self.wih_t = pad_gates(self.w_ih, E, Ep).T.astype(jnp.bfloat16)   # (Ep, 4Hp)
        self.whh_t = pad_gates(self.w_hh, H, Hp).T.astype(jnp.bfloat16)   # (Hp, 4Hp)
        b4 = (self.b_ih + self.b_hh).reshape(4, H)
        self.bias = jnp.pad(b4, ((0, 0), (0, Hp - H))).reshape(1, 4 * Hp).astype(jnp.float32)
        wd = jnp.pad(self.dec_w, ((0, Vp - V), (0, Hp - H)))
        self.wdec_t = wd.T.astype(jnp.bfloat16)                           # (Hp, Vp)
        self.bdec = jnp.pad(self.dec_b, (0, Vp - V)).reshape(1, Vp).astype(jnp.float32)
        self.emb_table_pad = jnp.pad(self.emb_table, ((0, 0), (0, Ep - E)))  # (V, Ep) f32

    def __call__(self, x, hidden=None, lengths=None):
        if lengths is not None:
            # TODO(synk): packed-sequence (lengths) path not implemented.
            raise NotImplementedError("packed sequences (lengths) are not supported")
        # TODO(synk): tie_weights / `down` projection not implemented (default False).
        B, T = x.shape
        H, Hp, V, Vp = self.rnn_size, self.H_pad, self.ntokens, self.V_pad
        Bp = _round_up(B, 8)

        # Embedding lookup (noise = dropout = 0 -> identity); gathered time-major
        # so the kernel's per-step gate reads are plain offsets.
        # TODO(synk): embedding gather could be fused into the kernel via scalar-prefetched ids.
        emb_tm = jnp.take(self.emb_table_pad, x.T, axis=0)                # (T, B, Ep) f32
        if Bp != B:
            emb_tm = jnp.pad(emb_tm, ((0, 0), (0, Bp - B), (0, 0)))

        h0 = jnp.zeros((Bp, Hp), jnp.float32)
        c0 = jnp.zeros((Bp, Hp), jnp.float32)
        if hidden is not None:
            h0 = h0.at[:B, :H].set(jnp.asarray(hidden[0], jnp.float32).reshape(B, H))
            c0 = c0.at[:B, :H].set(jnp.asarray(hidden[1], jnp.float32).reshape(B, H))

        logits, h_n, c_n = lstm_lm_forward(
            emb_tm, self.wih_t, self.whh_t, self.bias, self.wdec_t, self.bdec, h0, c0)

        decoded = logits[:B, :, :V] if (Bp != B or Vp != V) else logits
        h_n = h_n[:B, :H]
        c_n = c_n[:B, :H]
        # hidden as torch: (h_n, c_n), each (num_layers * num_dirs = 1, B, H)
        return decoded, (h_n[None, ...], c_n[None, ...])


# ---------------------------------------------------------------------------
# Pure-JAX reference (lax.scan LSTM, f32, unpadded) for numerical validation.
# ---------------------------------------------------------------------------
def _reference_forward(model, x, hidden=None):
    B, T = x.shape
    H = model.rnn_size
    emb = jnp.take(model.emb_table, x, axis=0)
    if hidden is None:
        h0 = jnp.zeros((B, H), jnp.float32)
        c0 = jnp.zeros((B, H), jnp.float32)
    else:
        h0 = jnp.asarray(hidden[0], jnp.float32).reshape(B, H)
        c0 = jnp.asarray(hidden[1], jnp.float32).reshape(B, H)

    def step(carry, x_t):
        h, c = carry
        gates = x_t @ model.w_ih.T + h @ model.w_hh.T + model.b_ih + model.b_hh
        i = jax.nn.sigmoid(gates[:, 0:H])
        f = jax.nn.sigmoid(gates[:, H:2 * H])
        g = jnp.tanh(gates[:, 2 * H:3 * H])
        o = jax.nn.sigmoid(gates[:, 3 * H:])
        c = f * c + i * g
        h = o * jnp.tanh(c)
        return (h, c), h

    (h_n, c_n), hs = lax.scan(step, (h0, c0), jnp.transpose(emb, (1, 0, 2)))
    out = jnp.transpose(hs, (1, 0, 2))                                 # (B, T, H)
    logits = out.reshape(B * T, H) @ model.dec_w.T + model.dec_b
    return logits.reshape(B, T, model.ntokens), h_n, c_n


if __name__ == "__main__":
    # Small shapes (padded internally to E=H=128, 4H=512, V=128, B=8).
    ntokens, emb_size, rnn_size = 128, 16, 32
    batch, seq = 2, 8

    root = jax.random.PRNGKey(0)
    k_param, k_data = jax.random.split(root)
    model = PallasLangModel(ntokens, emb_size=emb_size, rnn_size=rnn_size, key=k_param)
    x = jax.random.randint(k_data, (batch, seq), 0, ntokens, dtype=jnp.int32)

    decoded, (h_n, c_n) = model(x)
    jax.block_until_ready((decoded, h_n, c_n))

    assert decoded.shape == (batch, seq, ntokens)
    assert h_n.shape == (1, batch, rnn_size)
    assert c_n.shape == (1, batch, rnn_size)

    # Validate against the pure-JAX f32 reference (tolerance covers bf16 MXU operands).
    ref_dec, ref_h, ref_c = _reference_forward(model, x)
    err = max(float(jnp.max(jnp.abs(decoded - ref_dec))),
              float(jnp.max(jnp.abs(h_n[0] - ref_h))),
              float(jnp.max(jnp.abs(c_n[0] - ref_c))))
    assert err < 2e-2, f"mismatch vs reference: max abs err {err}"

    # Exercise the user-supplied `hidden` path with the same initial state.
    decoded2, (h2, c2) = model(x, hidden=(h_n, c_n))
    jax.block_until_ready((decoded2, h2, c2))
    ref_dec2, ref_h2, ref_c2 = _reference_forward(model, x, hidden=(h_n, c_n))
    err2 = max(float(jnp.max(jnp.abs(decoded2 - ref_dec2))),
               float(jnp.max(jnp.abs(h2[0] - ref_h2))),
               float(jnp.max(jnp.abs(c2[0] - ref_c2))))
    assert err2 < 2e-2, f"mismatch vs reference (with hidden): max abs err {err2}"

    print("KERNEL_OK")
</pallas_src>

<mosaic_0001>
module attributes {stable_mosaic.version = 11 : i64} {
  func.func @_lstm_lm_kernel(%arg0: i32, %arg1: i32, %arg2: i32, %arg3: memref<8x8x128xf32, #tpu.memory_space<vmem>>, %arg4: memref<128x512xbf16, #tpu.memory_space<vmem>>, %arg5: memref<128x512xbf16, #tpu.memory_space<vmem>>, %arg6: memref<1x512xf32, #tpu.memory_space<vmem>>, %arg7: memref<128x128xbf16, #tpu.memory_space<vmem>>, %arg8: memref<1x128xf32, #tpu.memory_space<vmem>>, %arg9: memref<8x128xf32, #tpu.memory_space<vmem>>, %arg10: memref<8x128xf32, #tpu.memory_space<vmem>>, %arg11: memref<8x8x128xf32, #tpu.memory_space<vmem>>, %arg12: memref<8x128xf32, #tpu.memory_space<vmem>>, %arg13: memref<8x128xf32, #tpu.memory_space<vmem>>, %arg14: memref<8x128xf32, #tpu.memory_space<vmem>>, %arg15: memref<8x128xf32, #tpu.memory_space<vmem>>, %arg16: memref<8x8x512xf32, #tpu.memory_space<vmem>>, %arg17: memref<8x8x128xf32, #tpu.memory_space<vmem>>) attributes {dimension_semantics = [#tpu.dimension_semantics<parallel>, #tpu.dimension_semantics<arbitrary>, #tpu.dimension_semantics<arbitrary>], iteration_bounds = array<i64: 1, 1, 1>, scalar_prefetch = 0 : i64, scratch_operands = 4 : i64, tpu.core_type = #tpu.core_type<tc>, window_params = [{transform_indices = @transform_0, window_bounds = array<i64: 8, 8, 128>}, {pipeline_mode = #tpu.pipeline_mode<synchronous>, transform_indices = @transform_1, window_bounds = array<i64: 128, 512>}, {pipeline_mode = #tpu.pipeline_mode<synchronous>, transform_indices = @transform_2, window_bounds = array<i64: 128, 512>}, {pipeline_mode = #tpu.pipeline_mode<synchronous>, transform_indices = @transform_3, window_bounds = array<i64: 1, 512>}, {transform_indices = @transform_4, window_bounds = array<i64: 128, 128>}, {transform_indices = @transform_5, window_bounds = array<i64: 1, 128>}, {transform_indices = @transform_6, window_bounds = array<i64: 8, 128>}, {transform_indices = @transform_7, window_bounds = array<i64: 8, 128>}, {transform_indices = @transform_8, window_bounds = array<i64: 8, 8, 128>}, {transform_indices = @transform_9, window_bounds = array<i64: 8, 128>}, {transform_indices = @transform_10, window_bounds = array<i64: 8, 128>}]} {
    %c0_i32 = arith.constant 0 : i32
    %0 = arith.cmpi eq, %arg2, %c0_i32 : i32
    %1 = arith.extui %0 : i1 to i32
    %c0_i32_0 = arith.constant 0 : i32
    %2 = arith.cmpi ne, %1, %c0_i32_0 : i32
    scf.if %2 {
      %c0_i32_18 = arith.constant 0 : i32
      %17 = arith.cmpi eq, %arg1, %c0_i32_18 : i32
      %18 = arith.extui %17 : i1 to i32
      %c0_i32_19 = arith.constant 0 : i32
      %19 = arith.cmpi ne, %18, %c0_i32_19 : i32
      scf.if %19 {
        %c0_106 = arith.constant 0 : index
        %c0_107 = arith.constant 0 : index
        %307 = vector.load %arg9[%c0_106, %c0_107] : memref<8x128xf32, #tpu.memory_space<vmem>>, vector<8x128xf32>
        %c0_108 = arith.constant 0 : index
        %c0_109 = arith.constant 0 : index
        %308 = vector.load %arg14[%c0_108, %c0_109] : memref<8x128xf32, #tpu.memory_space<vmem>>, vector<8x128xf32>
        tpu.vector_store %arg14[%c0_108, %c0_109], %307 {strides = array<i32>} : memref<8x128xf32, #tpu.memory_space<vmem>>, vector<8x128xf32>,
        %c0_110 = arith.constant 0 : index
        %c0_111 = arith.constant 0 : index
        %309 = vector.load %arg10[%c0_110, %c0_111] : memref<8x128xf32, #tpu.memory_space<vmem>>, vector<8x128xf32>
        %c0_112 = arith.constant 0 : index
        %c0_113 = arith.constant 0 : index
        %310 = vector.load %arg15[%c0_112, %c0_113] : memref<8x128xf32, #tpu.memory_space<vmem>>, vector<8x128xf32>
        tpu.vector_store %arg15[%c0_112, %c0_113], %309 {strides = array<i32>} : memref<8x128xf32, #tpu.memory_space<vmem>>, vector<8x128xf32>,
      } else {
      }
      %c0_20 = arith.constant 0 : index
      %c0_21 = arith.constant 0 : index
      %c0_22 = arith.constant 0 : index
      %20 = vector.load %arg3[%c0_20, %c0_21, %c0_22] : memref<8x8x128xf32, #tpu.memory_space<vmem>>, vector<8x8x128xf32>
      %21 = vector.shape_cast %20 : vector<8x8x128xf32> to vector<64x128xf32>
      %22 = arith.truncf %21 : vector<64x128xf32> to vector<64x128xbf16>
      %c0_23 = arith.constant 0 : index
      %c0_24 = arith.constant 0 : index
      %23 = vector.load %arg4[%c0_23, %c0_24] : memref<128x512xbf16, #tpu.memory_space<vmem>>, vector<128x512xbf16>
      %cst_25 = arith.constant dense<0.000000e+00> : vector<64x512xf32>
      %24 = tpu.matmul %22, %23, %cst_25 {dimension_numbers = #tpu.dot_dimension_numbers<[1], [0], [0], [1], [0, 0, 1, 1], [], []>} : vector<64x128xbf16>, vector<128x512xbf16>, vector<64x512xf32> -> vector<64x512xf32>
      %c0_26 = arith.constant 0 : index
      %c0_27 = arith.constant 0 : index
      %25 = vector.load %arg6[%c0_26, %c0_27] : memref<1x512xf32, #tpu.memory_space<vmem>>, vector<1x512xf32>
      %26 = vector.broadcast %25 : vector<1x512xf32> to vector<64x512xf32>
      %27 = arith.addf %24, %26 : vector<64x512xf32>
      %28 = vector.shape_cast %27 : vector<64x512xf32> to vector<8x8x512xf32>
      %c0_28 = arith.constant 0 : index
      %c0_29 = arith.constant 0 : index
      %c0_30 = arith.constant 0 : index
      %29 = vector.load %arg16[%c0_28, %c0_29, %c0_30] : memref<8x8x512xf32, #tpu.memory_space<vmem>>, vector<8x8x512xf32>
      tpu.vector_store %arg16[%c0_28, %c0_29, %c0_30], %28 {strides = array<i32>} : memref<8x8x512xf32, #tpu.memory_space<vmem>>, vector<8x8x512xf32>,
      %c0_31 = arith.constant 0 : index
      %c0_32 = arith.constant 0 : index
      %30 = vector.load %arg5[%c0_31, %c0_32] : memref<128x512xbf16, #tpu.memory_space<vmem>>, vector<128x512xbf16>
      %c0_33 = arith.constant 0 : index
      %c0_34 = arith.constant 0 : index
      %31 = vector.load %arg14[%c0_33, %c0_34] : memref<8x128xf32, #tpu.memory_space<vmem>>, vector<8x128xf32>
      %c0_35 = arith.constant 0 : index
      %c0_36 = arith.constant 0 : index
      %32 = vector.load %arg15[%c0_35, %c0_36] : memref<8x128xf32, #tpu.memory_space<vmem>>, vector<8x128xf32>
      %c0_i32_37 = arith.constant 0 : i32
      %33 = arith.index_cast %c0_i32_37 : i32 to index
      %c0_38 = arith.constant 0 : index
      %c0_39 = arith.constant 0 : index
      %34 = vector.load %arg16[%33, %c0_38, %c0_39] : memref<8x8x512xf32, #tpu.memory_space<vmem>>, vector<1x8x512xf32>
      %35 = vector.shape_cast %34 : vector<1x8x512xf32> to vector<8x512xf32>
      %36 = arith.truncf %31 : vector<8x128xf32> to vector<8x128xbf16>
      %cst_40 = arith.constant dense<0.000000e+00> : vector<8x512xf32>
      %37 = tpu.matmul %36, %30, %cst_40 {dimension_numbers = #tpu.dot_dimension_numbers<[1], [0], [0], [1], [0, 0, 1, 1], [], []>} : vector<8x128xbf16>, vector<128x512xbf16>, vector<8x512xf32> -> vector<8x512xf32>
      %38 = arith.addf %35, %37 : vector<8x512xf32>
      %39 = vector.extract_strided_slice %38 {offsets = [0, 0], sizes = [8, 128], strides = [1, 1]} : vector<8x512xf32> to vector<8x128xf32>
      %40 = arith.negf %39 : vector<8x128xf32>
      %41 = math.exp %40 : vector<8x128xf32>
      %cst_41 = arith.constant 1.000000e+00 : f32
      %42 = vector.broadcast %cst_41 : f32 to vector<8x128xf32>
      %43 = arith.addf %42, %41 : vector<8x128xf32>
      %44 = arith.divf %42, %43 : vector<8x128xf32>
      %45 = vector.extract_strided_slice %38 {offsets = [0, 128], sizes = [8, 128], strides = [1, 1]} : vector<8x512xf32> to vector<8x128xf32>
      %46 = arith.negf %45 : vector<8x128xf32>
      %47 = math.exp %46 : vector<8x128xf32>
      %cst_42 = arith.constant 1.000000e+00 : f32
      %48 = vector.broadcast %cst_42 : f32 to vector<8x128xf32>
      %49 = arith.addf %48, %47 : vector<8x128xf32>
      %50 = arith.divf %48, %49 : vector<8x128xf32>
      %51 = vector.extract_strided_slice %38 {offsets = [0, 256], sizes = [8, 128], strides = [1, 1]} : vector<8x512xf32> to vector<8x128xf32>
      %52 = math.tanh %51 : vector<8x128xf32>
      %53 = vector.extract_strided_slice %38 {offsets = [0, 384], sizes = [8, 128], strides = [1, 1]} : vector<8x512xf32> to vector<8x128xf32>
      %54 = arith.negf %53 : vector<8x128xf32>
      %55 = math.exp %54 : vector<8x128xf32>
      %cst_43 = arith.constant 1.000000e+00 : f32
      %56 = vector.broadcast %cst_43 : f32 to vector<8x128xf32>
      %57 = arith.addf %56, %55 : vector<8x128xf32>
      %58 = arith.divf %56, %57 : vector<8x128xf32>
      %59 = arith.mulf %50, %32 : vector<8x128xf32>
      %60 = arith.mulf %44, %52 : vector<8x128xf32>
      %61 = arith.addf %59, %60 : vector<8x128xf32>
      %62 = math.tanh %61 : vector<8x128xf32>
      %63 = arith.mulf %58, %62 : vector<8x128xf32>
      %64 = vector.shape_cast %63 : vector<8x128xf32> to vector<8x1x128xf32>
      %c0_44 = arith.constant 0 : index
      %65 = arith.index_cast %c0_i32_37 : i32 to index
      %c0_45 = arith.constant 0 : index
      %66 = vector.load %arg17[%c0_44, %65, %c0_45] : memref<8x8x128xf32, #tpu.memory_space<vmem>>, vector<8x1x128xf32>
      tpu.vector_store %arg17[%c0_44, %65, %c0_45], %64 {strides = array<i32>} : memref<8x8x128xf32, #tpu.memory_space<vmem>>, vector<8x1x128xf32>,
      %c1_i32 = arith.constant 1 : i32
      %67 = arith.index_cast %c1_i32 : i32 to index
      %c0_46 = arith.constant 0 : index
      %c0_47 = arith.constant 0 : index
      %68 = vector.load %arg16[%67, %c0_46, %c0_47] : memref<8x8x512xf32, #tpu.memory_space<vmem>>, vector<1x8x512xf32>
      %69 = vector.shape_cast %68 : vector<1x8x512xf32> to vector<8x512xf32>
      %70 = arith.truncf %63 : vector<8x128xf32> to vector<8x128xbf16>
      %cst_48 = arith.constant dense<0.000000e+00> : vector<8x512xf32>
      %71 = tpu.matmul %70, %30, %cst_48 {dimension_numbers = #tpu.dot_dimension_numbers<[1], [0], [0], [1], [0, 0, 1, 1], [], []>} : vector<8x128xbf16>, vector<128x512xbf16>, vector<8x512xf32> -> vector<8x512xf32>
      %72 = arith.addf %69, %71 : vector<8x512xf32>
      %73 = vector.extract_strided_slice %72 {offsets = [0, 0], sizes = [8, 128], strides = [1, 1]} : vector<8x512xf32> to vector<8x128xf32>
      %74 = arith.negf %73 : vector<8x128xf32>
      %75 = math.exp %74 : vector<8x128xf32>
      %cst_49 = arith.constant 1.000000e+00 : f32
      %76 = vector.broadcast %cst_49 : f32 to vector<8x128xf32>
      %77 = arith.addf %76, %75 : vector<8x128xf32>
      %78 = arith.divf %76, %77 : vector<8x128xf32>
      %79 = vector.extract_strided_slice %72 {offsets = [0, 128], sizes = [8, 128], strides = [1, 1]} : vector<8x512xf32> to vector<8x128xf32>
      %80 = arith.negf %79 : vector<8x128xf32>
      %81 = math.exp %80 : vector<8x128xf32>
      %cst_50 = arith.constant 1.000000e+00 : f32
      %82 = vector.broadcast %cst_50 : f32 to vector<8x128xf32>
      %83 = arith.addf %82, %81 : vector<8x128xf32>
      %84 = arith.divf %82, %83 : vector<8x128xf32>
      %85 = vector.extract_strided_slice %72 {offsets = [0, 256], sizes = [8, 128], strides = [1, 1]} : vector<8x512xf32> to vector<8x128xf32>
      %86 = math.tanh %85 : vector<8x128xf32>
      %87 = vector.extract_strided_slice %72 {offsets = [0, 384], sizes = [8, 128], strides = [1, 1]} : vector<8x512xf32> to vector<8x128xf32>
      %88 = arith.negf %87 : vector<8x128xf32>
      %89 = math.exp %88 : vector<8x128xf32>
      %cst_51 = arith.constant 1.000000e+00 : f32
      %90 = vector.broadcast %cst_51 : f32 to vector<8x128xf32>
      %91 = arith.addf %90, %89 : vector<8x128xf32>
      %92 = arith.divf %90, %91 : vector<8x128xf32>
      %93 = arith.mulf %84, %61 : vector<8x128xf32>
      %94 = arith.mulf %78, %86 : vector<8x128xf32>
      %95 = arith.addf %93, %94 : vector<8x128xf32>
      %96 = math.tanh %95 : vector<8x128xf32>
      %97 = arith.mulf %92, %96 : vector<8x128xf32>
      %98 = vector.shape_cast %97 : vector<8x128xf32> to vector<8x1x128xf32>
      %c0_52 = arith.constant 0 : index
      %99 = arith.index_cast %c1_i32 : i32 to index
      %c0_53 = arith.constant 0 : index
      %100 = vector.load %arg17[%c0_52, %99, %c0_53] : memref<8x8x128xf32, #tpu.memory_space<vmem>>, vector<8x1x128xf32>
      tpu.vector_store %arg17[%c0_52, %99, %c0_53], %98 {strides = array<i32>} : memref<8x8x128xf32, #tpu.memory_space<vmem>>, vector<8x1x128xf32>,
      %c2_i32 = arith.constant 2 : i32
      %101 = arith.index_cast %c2_i32 : i32 to index
      %c0_54 = arith.constant 0 : index
      %c0_55 = arith.constant 0 : index
      %102 = vector.load %arg16[%101, %c0_54, %c0_55] : memref<8x8x512xf32, #tpu.memory_space<vmem>>, vector<1x8x512xf32>
      %103 = vector.shape_cast %102 : vector<1x8x512xf32> to vector<8x512xf32>
      %104 = arith.truncf %97 : vector<8x128xf32> to vector<8x128xbf16>
      %cst_56 = arith.constant dense<0.000000e+00> : vector<8x512xf32>
      %105 = tpu.matmul %104, %30, %cst_56 {dimension_numbers = #tpu.dot_dimension_numbers<[1], [0], [0], [1], [0, 0, 1, 1], [], []>} : vector<8x128xbf16>, vector<128x512xbf16>, vector<8x512xf32> -> vector<8x512xf32>
      %106 = arith.addf %103, %105 : vector<8x512xf32>
      %107 = vector.extract_strided_slice %106 {offsets = [0, 0], sizes = [8, 128], strides = [1, 1]} : vector<8x512xf32> to vector<8x128xf32>
      %108 = arith.negf %107 : vector<8x128xf32>
      %109 = math.exp %108 : vector<8x128xf32>
      %cst_57 = arith.constant 1.000000e+00 : f32
      %110 = vector.broadcast %cst_57 : f32 to vector<8x128xf32>
      %111 = arith.addf %110, %109 : vector<8x128xf32>
      %112 = arith.divf %110, %111 : vector<8x128xf32>
      %113 = vector.extract_strided_slice %106 {offsets = [0, 128], sizes = [8, 128], strides = [1, 1]} : vector<8x512xf32> to vector<8x128xf32>
      %114 = arith.negf %113 : vector<8x128xf32>
      %115 = math.exp %114 : vector<8x128xf32>
      %cst_58 = arith.constant 1.000000e+00 : f32
      %116 = vector.broadcast %cst_58 : f32 to vector<8x128xf32>
      %117 = arith.addf %116, %115 : vector<8x128xf32>
      %118 = arith.divf %116, %117 : vector<8x128xf32>
      %119 = vector.extract_strided_slice %106 {offsets = [0, 256], sizes = [8, 128], strides = [1, 1]} : vector<8x512xf32> to vector<8x128xf32>
      %120 = math.tanh %119 : vector<8x128xf32>
      %121 = vector.extract_strided_slice %106 {offsets = [0, 384], sizes = [8, 128], strides = [1, 1]} : vector<8x512xf32> to vector<8x128xf32>
      %122 = arith.negf %121 : vector<8x128xf32>
      %123 = math.exp %122 : vector<8x128xf32>
      %cst_59 = arith.constant 1.000000e+00 : f32
      %124 = vector.broadcast %cst_59 : f32 to vector<8x128xf32>
      %125 = arith.addf %124, %123 : vector<8x128xf32>
      %126 = arith.divf %124, %125 : vector<8x128xf32>
      %127 = arith.mulf %118, %95 : vector<8x128xf32>
      %128 = arith.mulf %112, %120 : vector<8x128xf32>
      %129 = arith.addf %127, %128 : vector<8x128xf32>
      %130 = math.tanh %129 : vector<8x128xf32>
      %131 = arith.mulf %126, %130 : vector<8x128xf32>
      %132 = vector.shape_cast %131 : vector<8x128xf32> to vector<8x1x128xf32>
      %c0_60 = arith.constant 0 : index
      %133 = arith.index_cast %c2_i32 : i32 to index
      %c0_61 = arith.constant 0 : index
      %134 = vector.load %arg17[%c0_60, %133, %c0_61] : memref<8x8x128xf32, #tpu.memory_space<vmem>>, vector<8x1x128xf32>
      tpu.vector_store %arg17[%c0_60, %133, %c0_61], %132 {strides = array<i32>} : memref<8x8x128xf32, #tpu.memory_space<vmem>>, vector<8x1x128xf32>,
      %c3_i32 = arith.constant 3 : i32
      %135 = arith.index_cast %c3_i32 : i32 to index
      %c0_62 = arith.constant 0 : index
      %c0_63 = arith.constant 0 : index
      %136 = vector.load %arg16[%135, %c0_62, %c0_63] : memref<8x8x512xf32, #tpu.memory_space<vmem>>, vector<1x8x512xf32>
      %137 = vector.shape_cast %136 : vector<1x8x512xf32> to vector<8x512xf32>
      %138 = arith.truncf %131 : vector<8x128xf32> to vector<8x128xbf16>
      %cst_64 = arith.constant dense<0.000000e+00> : vector<8x512xf32>
      %139 = tpu.matmul %138, %30, %cst_64 {dimension_numbers = #tpu.dot_dimension_numbers<[1], [0], [0], [1], [0, 0, 1, 1], [], []>} : vector<8x128xbf16>, vector<128x512xbf16>, vector<8x512xf32> -> vector<8x512xf32>
      %140 = arith.addf %137, %139 : vector<8x512xf32>
      %141 = vector.extract_strided_slice %140 {offsets = [0, 0], sizes = [8, 128], strides = [1, 1]} : vector<8x512xf32> to vector<8x128xf32>
      %142 = arith.negf %141 : vector<8x128xf32>
      %143 = math.exp %142 : vector<8x128xf32>
      %cst_65 = arith.constant 1.000000e+00 : f32
      %144 = vector.broadcast %cst_65 : f32 to vector<8x128xf32>
      %145 = arith.addf %144, %143 : vector<8x128xf32>
      %146 = arith.divf %144, %145 : vector<8x128xf32>
      %147 = vector.extract_strided_slice %140 {offsets = [0, 128], sizes = [8, 128], strides = [1, 1]} : vector<8x512xf32> to vector<8x128xf32>
      %148 = arith.negf %147 : vector<8x128xf32>
      %149 = math.exp %148 : vector<8x128xf32>
      %cst_66 = arith.constant 1.000000e+00 : f32
      %150 = vector.broadcast %cst_66 : f32 to vector<8x128xf32>
      %151 = arith.addf %150, %149 : vector<8x128xf32>
      %152 = arith.divf %150, %151 : vector<8x128xf32>
      %153 = vector.extract_strided_slice %140 {offsets = [0, 256], sizes = [8, 128], strides = [1, 1]} : vector<8x512xf32> to vector<8x128xf32>
      %154 = math.tanh %153 : vector<8x128xf32>
      %155 = vector.extract_strided_slice %140 {offsets = [0, 384], sizes = [8, 128], strides = [1, 1]} : vector<8x512xf32> to vector<8x128xf32>
      %156 = arith.negf %155 : vector<8x128xf32>
      %157 = math.exp %156 : vector<8x128xf32>
      %cst_67 = arith.constant 1.000000e+00 : f32
      %158 = vector.broadcast %cst_67 : f32 to vector<8x128xf32>
      %159 = arith.addf %158, %157 : vector<8x128xf32>
      %160 = arith.divf %158, %159 : vector<8x128xf32>
      %161 = arith.mulf %152, %129 : vector<8x128xf32>
      %162 = arith.mulf %146, %154 : vector<8x128xf32>
      %163 = arith.addf %161, %162 : vector<8x128xf32>
      %164 = math.tanh %163 : vector<8x128xf32>
      %165 = arith.mulf %160, %164 : vector<8x128xf32>
      %166 = vector.shape_cast %165 : vector<8x128xf32> to vector<8x1x128xf32>
      %c0_68 = arith.constant 0 : index
      %167 = arith.index_cast %c3_i32 : i32 to index
      %c0_69 = arith.constant 0 : index
      %168 = vector.load %arg17[%c0_68, %167, %c0_69] : memref<8x8x128xf32, #tpu.memory_space<vmem>>, vector<8x1x128xf32>
      tpu.vector_store %arg17[%c0_68, %167, %c0_69], %166 {strides = array<i32>} : memref<8x8x128xf32, #tpu.memory_space<vmem>>, vector<8x1x128xf32>,
      %c4_i32 = arith.constant 4 : i32
      %169 = arith.index_cast %c4_i32 : i32 to index
      %c0_70 = arith.constant 0 : index
      %c0_71 = arith.constant 0 : index
      %170 = vector.load %arg16[%169, %c0_70, %c0_71] : memref<8x8x512xf32, #tpu.memory_space<vmem>>, vector<1x8x512xf32>
      %171 = vector.shape_cast %170 : vector<1x8x512xf32> to vector<8x512xf32>
      %172 = arith.truncf %165 : vector<8x128xf32> to vector<8x128xbf16>
      %cst_72 = arith.constant dense<0.000000e+00> : vector<8x512xf32>
      %173 = tpu.matmul %172, %30, %cst_72 {dimension_numbers = #tpu.dot_dimension_numbers<[1], [0], [0], [1], [0, 0, 1, 1], [], []>} : vector<8x128xbf16>, vector<128x512xbf16>, vector<8x512xf32> -> vector<8x512xf32>
      %174 = arith.addf %171, %173 : vector<8x512xf32>
      %175 = vector.extract_strided_slice %174 {offsets = [0, 0], sizes = [8, 128], strides = [1, 1]} : vector<8x512xf32> to vector<8x128xf32>
      %176 = arith.negf %175 : vector<8x128xf32>
      %177 = math.exp %176 : vector<8x128xf32>
      %cst_73 = arith.constant 1.000000e+00 : f32
      %178 = vector.broadcast %cst_73 : f32 to vector<8x128xf32>
      %179 = arith.addf %178, %177 : vector<8x128xf32>
      %180 = arith.divf %178, %179 : vector<8x128xf32>
      %181 = vector.extract_strided_slice %174 {offsets = [0, 128], sizes = [8, 128], strides = [1, 1]} : vector<8x512xf32> to vector<8x128xf32>
      %182 = arith.negf %181 : vector<8x128xf32>
      %183 = math.exp %182 : vector<8x128xf32>
      %cst_74 = arith.constant 1.000000e+00 : f32
      %184 = vector.broadcast %cst_74 : f32 to vector<8x128xf32>
      %185 = arith.addf %184, %183 : vector<8x128xf32>
      %186 = arith.divf %184, %185 : vector<8x128xf32>
      %187 = vector.extract_strided_slice %174 {offsets = [0, 256], sizes = [8, 128], strides = [1, 1]} : vector<8x512xf32> to vector<8x128xf32>
      %188 = math.tanh %187 : vector<8x128xf32>
      %189 = vector.extract_strided_slice %174 {offsets = [0, 384], sizes = [8, 128], strides = [1, 1]} : vector<8x512xf32> to vector<8x128xf32>
      %190 = arith.negf %189 : vector<8x128xf32>
      %191 = math.exp %190 : vector<8x128xf32>
      %cst_75 = arith.constant 1.000000e+00 : f32
      %192 = vector.broadcast %cst_75 : f32 to vector<8x128xf32>
      %193 = arith.addf %192, %191 : vector<8x128xf32>
      %194 = arith.divf %192, %193 : vector<8x128xf32>
      %195 = arith.mulf %186, %163 : vector<8x128xf32>
      %196 = arith.mulf %180, %188 : vector<8x128xf32>
      %197 = arith.addf %195, %196 : vector<8x128xf32>
      %198 = math.tanh %197 : vector<8x128xf32>
      %199 = arith.mulf %194, %198 : vector<8x128xf32>
      %200 = vector.shape_cast %199 : vector<8x128xf32> to vector<8x1x128xf32>
      %c0_76 = arith.constant 0 : index
      %201 = arith.index_cast %c4_i32 : i32 to index
      %c0_77 = arith.constant 0 : index
      %202 = vector.load %arg17[%c0_76, %201, %c0_77] : memref<8x8x128xf32, #tpu.memory_space<vmem>>, vector<8x1x128xf32>
      tpu.vector_store %arg17[%c0_76, %201, %c0_77], %200 {strides = array<i32>} : memref<8x8x128xf32, #tpu.memory_space<vmem>>, vector<8x1x128xf32>,
      %c5_i32 = arith.constant 5 : i32
      %203 = arith.index_cast %c5_i32 : i32 to index
      %c0_78 = arith.constant 0 : index
      %c0_79 = arith.constant 0 : index
      %204 = vector.load %arg16[%203, %c0_78, %c0_79] : memref<8x8x512xf32, #tpu.memory_space<vmem>>, vector<1x8x512xf32>
      %205 = vector.shape_cast %204 : vector<1x8x512xf32> to vector<8x512xf32>
      %206 = arith.truncf %199 : vector<8x128xf32> to vector<8x128xbf16>
      %cst_80 = arith.constant dense<0.000000e+00> : vector<8x512xf32>
      %207 = tpu.matmul %206, %30, %cst_80 {dimension_numbers = #tpu.dot_dimension_numbers<[1], [0], [0], [1], [0, 0, 1, 1], [], []>} : vector<8x128xbf16>, vector<128x512xbf16>, vector<8x512xf32> -> vector<8x512xf32>
      %208 = arith.addf %205, %207 : vector<8x512xf32>
      %209 = vector.extract_strided_slice %208 {offsets = [0, 0], sizes = [8, 128], strides = [1, 1]} : vector<8x512xf32> to vector<8x128xf32>
      %210 = arith.negf %209 : vector<8x128xf32>
      %211 = math.exp %210 : vector<8x128xf32>
      %cst_81 = arith.constant 1.000000e+00 : f32
      %212 = vector.broadcast %cst_81 : f32 to vector<8x128xf32>
      %213 = arith.addf %212, %211 : vector<8x128xf32>
      %214 = arith.divf %212, %213 : vector<8x128xf32>
      %215 = vector.extract_strided_slice %208 {offsets = [0, 128], sizes = [8, 128], strides = [1, 1]} : vector<8x512xf32> to vector<8x128xf32>
      %216 = arith.negf %215 : vector<8x128xf32>
      %217 = math.exp %216 : vector<8x128xf32>
      %cst_82 = arith.constant 1.000000e+00 : f32
      %218 = vector.broadcast %cst_82 : f32 to vector<8x128xf32>
      %219 = arith.addf %218, %217 : vector<8x128xf32>
      %220 = arith.divf %218, %219 : vector<8x128xf32>
      %221 = vector.extract_strided_slice %208 {offsets = [0, 256], sizes = [8, 128], strides = [1, 1]} : vector<8x512xf32> to vector<8x128xf32>
      %222 = math.tanh %221 : vector<8x128xf32>
      %223 = vector.extract_strided_slice %208 {offsets = [0, 384], sizes = [8, 128], strides = [1, 1]} : vector<8x512xf32> to vector<8x128xf32>
      %224 = arith.negf %223 : vector<8x128xf32>
      %225 = math.exp %224 : vector<8x128xf32>
      %cst_83 = arith.constant 1.000000e+00 : f32
      %226 = vector.broadcast %cst_83 : f32 to vector<8x128xf32>
      %227 = arith.addf %226, %225 : vector<8x128xf32>
      %228 = arith.divf %226, %227 : vector<8x128xf32>
      %229 = arith.mulf %220, %197 : vector<8x128xf32>
      %230 = arith.mulf %214, %222 : vector<8x128xf32>
      %231 = arith.addf %229, %230 : vector<8x128xf32>
      %232 = math.tanh %231 : vector<8x128xf32>
      %233 = arith.mulf %228, %232 : vector<8x128xf32>
      %234 = vector.shape_cast %233 : vector<8x128xf32> to vector<8x1x128xf32>
      %c0_84 = arith.constant 0 : index
      %235 = arith.index_cast %c5_i32 : i32 to index
      %c0_85 = arith.constant 0 : index
      %236 = vector.load %arg17[%c0_84, %235, %c0_85] : memref<8x8x128xf32, #tpu.memory_space<vmem>>, vector<8x1x128xf32>
      tpu.vector_store %arg17[%c0_84, %235, %c0_85], %234 {strides = array<i32>} : memref<8x8x128xf32, #tpu.memory_space<vmem>>, vector<8x1x128xf32>,
      %c6_i32 = arith.constant 6 : i32
      %237 = arith.index_cast %c6_i32 : i32 to index
      %c0_86 = arith.constant 0 : index
      %c0_87 = arith.constant 0 : index
      %238 = vector.load %arg16[%237, %c0_86, %c0_87] : memref<8x8x512xf32, #tpu.memory_space<vmem>>, vector<1x8x512xf32>
      %239 = vector.shape_cast %238 : vector<1x8x512xf32> to vector<8x512xf32>
      %240 = arith.truncf %233 : vector<8x128xf32> to vector<8x128xbf16>
      %cst_88 = arith.constant dense<0.000000e+00> : vector<8x512xf32>
      %241 = tpu.matmul %240, %30, %cst_88 {dimension_numbers = #tpu.dot_dimension_numbers<[1], [0], [0], [1], [0, 0, 1, 1], [], []>} : vector<8x128xbf16>, vector<128x512xbf16>, vector<8x512xf32> -> vector<8x512xf32>
      %242 = arith.addf %239, %241 : vector<8x512xf32>
      %243 = vector.extract_strided_slice %242 {offsets = [0, 0], sizes = [8, 128], strides = [1, 1]} : vector<8x512xf32> to vector<8x128xf32>
      %244 = arith.negf %243 : vector<8x128xf32>
      %245 = math.exp %244 : vector<8x128xf32>
      %cst_89 = arith.constant 1.000000e+00 : f32
      %246 = vector.broadcast %cst_89 : f32 to vector<8x128xf32>
      %247 = arith.addf %246, %245 : vector<8x128xf32>
      %248 = arith.divf %246, %247 : vector<8x128xf32>
      %249 = vector.extract_strided_slice %242 {offsets = [0, 128], sizes = [8, 128], strides = [1, 1]} : vector<8x512xf32> to vector<8x128xf32>
      %250 = arith.negf %249 : vector<8x128xf32>
      %251 = math.exp %250 : vector<8x128xf32>
      %cst_90 = arith.constant 1.000000e+00 : f32
      %252 = vector.broadcast %cst_90 : f32 to vector<8x128xf32>
      %253 = arith.addf %252, %251 : vector<8x128xf32>
      %254 = arith.divf %252, %253 : vector<8x128xf32>
      %255 = vector.extract_strided_slice %242 {offsets = [0, 256], sizes = [8, 128], strides = [1, 1]} : vector<8x512xf32> to vector<8x128xf32>
      %256 = math.tanh %255 : vector<8x128xf32>
      %257 = vector.extract_strided_slice %242 {offsets = [0, 384], sizes = [8, 128], strides = [1, 1]} : vector<8x512xf32> to vector<8x128xf32>
      %258 = arith.negf %257 : vector<8x128xf32>
      %259 = math.exp %258 : vector<8x128xf32>
      %cst_91 = arith.constant 1.000000e+00 : f32
      %260 = vector.broadcast %cst_91 : f32 to vector<8x128xf32>
      %261 = arith.addf %260, %259 : vector<8x128xf32>
      %262 = arith.divf %260, %261 : vector<8x128xf32>
      %263 = arith.mulf %254, %231 : vector<8x128xf32>
      %264 = arith.mulf %248, %256 : vector<8x128xf32>
      %265 = arith.addf %263, %264 : vector<8x128xf32>
      %266 = math.tanh %265 : vector<8x128xf32>
      %267 = arith.mulf %262, %266 : vector<8x128xf32>
      %268 = vector.shape_cast %267 : vector<8x128xf32> to vector<8x1x128xf32>
      %c0_92 = arith.constant 0 : index
      %269 = arith.index_cast %c6_i32 : i32 to index
      %c0_93 = arith.constant 0 : index
      %270 = vector.load %arg17[%c0_92, %269, %c0_93] : memref<8x8x128xf32, #tpu.memory_space<vmem>>, vector<8x1x128xf32>
      tpu.vector_store %arg17[%c0_92, %269, %c0_93], %268 {strides = array<i32>} : memref<8x8x128xf32, #tpu.memory_space<vmem>>, vector<8x1x128xf32>,
      %c7_i32 = arith.constant 7 : i32
      %271 = arith.index_cast %c7_i32 : i32 to index
      %c0_94 = arith.constant 0 : index
      %c0_95 = arith.constant 0 : index
      %272 = vector.load %arg16[%271, %c0_94, %c0_95] : memref<8x8x512xf32, #tpu.memory_space<vmem>>, vector<1x8x512xf32>
      %273 = vector.shape_cast %272 : vector<1x8x512xf32> to vector<8x512xf32>
      %274 = arith.truncf %267 : vector<8x128xf32> to vector<8x128xbf16>
      %cst_96 = arith.constant dense<0.000000e+00> : vector<8x512xf32>
      %275 = tpu.matmul %274, %30, %cst_96 {dimension_numbers = #tpu.dot_dimension_numbers<[1], [0], [0], [1], [0, 0, 1, 1], [], []>} : vector<8x128xbf16>, vector<128x512xbf16>, vector<8x512xf32> -> vector<8x512xf32>
      %276 = arith.addf %273, %275 : vector<8x512xf32>
      %277 = vector.extract_strided_slice %276 {offsets = [0, 0], sizes = [8, 128], strides = [1, 1]} : vector<8x512xf32> to vector<8x128xf32>
      %278 = arith.negf %277 : vector<8x128xf32>
      %279 = math.exp %278 : vector<8x128xf32>
      %cst_97 = arith.constant 1.000000e+00 : f32
      %280 = vector.broadcast %cst_97 : f32 to vector<8x128xf32>
      %281 = arith.addf %280, %279 : vector<8x128xf32>
      %282 = arith.divf %280, %281 : vector<8x128xf32>
      %283 = vector.extract_strided_slice %276 {offsets = [0, 128], sizes = [8, 128], strides = [1, 1]} : vector<8x512xf32> to vector<8x128xf32>
      %284 = arith.negf %283 : vector<8x128xf32>
      %285 = math.exp %284 : vector<8x128xf32>
      %cst_98 = arith.constant 1.000000e+00 : f32
      %286 = vector.broadcast %cst_98 : f32 to vector<8x128xf32>
      %287 = arith.addf %286, %285 : vector<8x128xf32>
      %288 = arith.divf %286, %287 : vector<8x128xf32>
      %289 = vector.extract_strided_slice %276 {offsets = [0, 256], sizes = [8, 128], strides = [1, 1]} : vector<8x512xf32> to vector<8x128xf32>
      %290 = math.tanh %289 : vector<8x128xf32>
      %291 = vector.extract_strided_slice %276 {offsets = [0, 384], sizes = [8, 128], strides = [1, 1]} : vector<8x512xf32> to vector<8x128xf32>
      %292 = arith.negf %291 : vector<8x128xf32>
      %293 = math.exp %292 : vector<8x128xf32>
      %cst_99 = arith.constant 1.000000e+00 : f32
      %294 = vector.broadcast %cst_99 : f32 to vector<8x128xf32>
      %295 = arith.addf %294, %293 : vector<8x128xf32>
      %296 = arith.divf %294, %295 : vector<8x128xf32>
      %297 = arith.mulf %288, %265 : vector<8x128xf32>
      %298 = arith.mulf %282, %290 : vector<8x128xf32>
      %299 = arith.addf %297, %298 : vector<8x128xf32>
      %300 = math.tanh %299 : vector<8x128xf32>
      %301 = arith.mulf %296, %300 : vector<8x128xf32>
      %302 = vector.shape_cast %301 : vector<8x128xf32> to vector<8x1x128xf32>
      %c0_100 = arith.constant 0 : index
      %303 = arith.index_cast %c7_i32 : i32 to index
      %c0_101 = arith.constant 0 : index
      %304 = vector.load %arg17[%c0_100, %303, %c0_101] : memref<8x8x128xf32, #tpu.memory_space<vmem>>, vector<8x1x128xf32>
      tpu.vector_store %arg17[%c0_100, %303, %c0_101], %302 {strides = array<i32>} : memref<8x8x128xf32, #tpu.memory_space<vmem>>, vector<8x1x128xf32>,
      %c8_i32 = arith.constant 8 : i32
      %c0_102 = arith.constant 0 : index
      %c0_103 = arith.constant 0 : index
      %305 = vector.load %arg14[%c0_102, %c0_103] : memref<8x128xf32, #tpu.memory_space<vmem>>, vector<8x128xf32>
      tpu.vector_store %arg14[%c0_102, %c0_103], %301 {strides = array<i32>} : memref<8x128xf32, #tpu.memory_space<vmem>>, vector<8x128xf32>,
      %c0_104 = arith.constant 0 : index
      %c0_105 = arith.constant 0 : index
      %306 = vector.load %arg15[%c0_104, %c0_105] : memref<8x128xf32, #tpu.memory_space<vmem>>, vector<8x128xf32>
      tpu.vector_store %arg15[%c0_104, %c0_105], %299 {strides = array<i32>} : memref<8x128xf32, #tpu.memory_space<vmem>>, vector<8x128xf32>,
    } else {
    }
    %c0 = arith.constant 0 : index
    %c0_1 = arith.constant 0 : index
    %3 = vector.load %arg14[%c0, %c0_1] : memref<8x128xf32, #tpu.memory_space<vmem>>, vector<8x128xf32>
    %c0_2 = arith.constant 0 : index
    %c0_3 = arith.constant 0 : index
    %4 = vector.load %arg12[%c0_2, %c0_3] : memref<8x128xf32, #tpu.memory_space<vmem>>, vector<8x128xf32>
    tpu.vector_store %arg12[%c0_2, %c0_3], %3 {strides = array<i32>} : memref<8x128xf32, #tpu.memory_space<vmem>>, vector<8x128xf32>,
    %c0_4 = arith.constant 0 : index
    %c0_5 = arith.constant 0 : index
    %5 = vector.load %arg15[%c0_4, %c0_5] : memref<8x128xf32, #tpu.memory_space<vmem>>, vector<8x128xf32>
    %c0_6 = arith.constant 0 : index
    %c0_7 = arith.constant 0 : index
    %6 = vector.load %arg13[%c0_6, %c0_7] : memref<8x128xf32, #tpu.memory_space<vmem>>, vector<8x128xf32>
    tpu.vector_store %arg13[%c0_6, %c0_7], %5 {strides = array<i32>} : memref<8x128xf32, #tpu.memory_space<vmem>>, vector<8x128xf32>,
    %c0_8 = arith.constant 0 : index
    %c0_9 = arith.constant 0 : index
    %c0_10 = arith.constant 0 : index
    %7 = vector.load %arg17[%c0_8, %c0_9, %c0_10] : memref<8x8x128xf32, #tpu.memory_space<vmem>>, vector<8x8x128xf32>
    %8 = vector.shape_cast %7 : vector<8x8x128xf32> to vector<64x128xf32>
    %9 = arith.truncf %8 : vector<64x128xf32> to vector<64x128xbf16>
    %c0_11 = arith.constant 0 : index
    %c0_12 = arith.constant 0 : index
    %10 = vector.load %arg7[%c0_11, %c0_12] : memref<128x128xbf16, #tpu.memory_space<vmem>>, vector<128x128xbf16>
    %cst = arith.constant dense<0.000000e+00> : vector<64x128xf32>
    %11 = tpu.matmul %9, %10, %cst {dimension_numbers = #tpu.dot_dimension_numbers<[1], [0], [0], [1], [0, 0, 1, 1], [], []>} : vector<64x128xbf16>, vector<128x128xbf16>, vector<64x128xf32> -> vector<64x128xf32>
    %c0_13 = arith.constant 0 : index
    %c0_14 = arith.constant 0 : index
    %12 = vector.load %arg8[%c0_13, %c0_14] : memref<1x128xf32, #tpu.memory_space<vmem>>, vector<1x128xf32>
    %13 = vector.broadcast %12 : vector<1x128xf32> to vector<64x128xf32>
    %14 = arith.addf %11, %13 : vector<64x128xf32>
    %15 = vector.shape_cast %14 : vector<64x128xf32> to vector<8x8x128xf32>
    %c0_15 = arith.constant 0 : index
    %c0_16 = arith.constant 0 : index
    %c0_17 = arith.constant 0 : index
    %16 = vector.load %arg11[%c0_15, %c0_16, %c0_17] : memref<8x8x128xf32, #tpu.memory_space<vmem>>, vector<8x8x128xf32>
    tpu.vector_store %arg11[%c0_15, %c0_16, %c0_17], %15 {strides = array<i32>} : memref<8x8x128xf32, #tpu.memory_space<vmem>>, vector<8x8x128xf32>,
    return
  }
  func.func @transform_0(%arg0: i32, %arg1: i32, %arg2: i32) -> (i32, i32, i32) {
    %c0_i32 = arith.constant 0 : i32
    %c0_i32_0 = arith.constant 0 : i32
    return %arg1, %arg0, %c0_i32 : i32, i32, i32
  }
  func.func @transform_1(%arg0: i32, %arg1: i32, %arg2: i32) -> (i32, i32) {
    %c0_i32 = arith.constant 0 : i32
    %c0_i32_0 = arith.constant 0 : i32
    %c0_i32_1 = arith.constant 0 : i32
    return %c0_i32, %c0_i32_0 : i32, i32
  }
  func.func @transform_2(%arg0: i32, %arg1: i32, %arg2: i32) -> (i32, i32) {
    %c0_i32 = arith.constant 0 : i32
    %c0_i32_0 = arith.constant 0 : i32
    %c0_i32_1 = arith.constant 0 : i32
    return %c0_i32, %c0_i32_0 : i32, i32
  }
  func.func @transform_3(%arg0: i32, %arg1: i32, %arg2: i32) -> (i32, i32) {
    %c0_i32 = arith.constant 0 : i32
    %c0_i32_0 = arith.constant 0 : i32
    %c0_i32_1 = arith.constant 0 : i32
    return %c0_i32, %c0_i32_0 : i32, i32
  }
  func.func @transform_4(%arg0: i32, %arg1: i32, %arg2: i32) -> (i32, i32) {
    %c0_i32 = arith.constant 0 : i32
    %c0_i32_0 = arith.constant 0 : i32
    return %c0_i32, %arg2 : i32, i32
  }
  func.func @transform_5(%arg0: i32, %arg1: i32, %arg2: i32) -> (i32, i32) {
    %c0_i32 = arith.constant 0 : i32
    %c0_i32_0 = arith.constant 0 : i32
    return %c0_i32, %arg2 : i32, i32
  }
  func.func @transform_6(%arg0: i32, %arg1: i32, %arg2: i32) -> (i32, i32) {
    %c0_i32 = arith.constant 0 : i32
    %c0_i32_0 = arith.constant 0 : i32
    return %arg0, %c0_i32 : i32, i32
  }
  func.func @transform_7(%arg0: i32, %arg1: i32, %arg2: i32) -> (i32, i32) {
    %c0_i32 = arith.constant 0 : i32
    %c0_i32_0 = arith.constant 0 : i32
    return %arg0, %c0_i32 : i32, i32
  }
  func.func @transform_8(%arg0: i32, %arg1: i32, %arg2: i32) -> (i32, i32, i32) {
    %c0_i32 = arith.constant 0 : i32
    return %arg0, %arg1, %arg2 : i32, i32, i32
  }
  func.func @transform_9(%arg0: i32, %arg1: i32, %arg2: i32) -> (i32, i32) {
    %c0_i32 = arith.constant 0 : i32
    %c0_i32_0 = arith.constant 0 : i32
    return %arg0, %c0_i32 : i32, i32
  }
  func.func @transform_10(%arg0: i32, %arg1: i32, %arg2: i32) -> (i32, i32) {
    %c0_i32 = arith.constant 0 : i32
    %c0_i32_0 = arith.constant 0 : i32
    return %arg0, %c0_i32 : i32, i32
  }
}

</mosaic_0001>

<llo_original>
// kernel: tpu_custom_call.1
$region0: #{tpu_custom_call.1}
  #allocation0 [shape = 'u32[]', space=smem, size = 0x4, offset = 0x4, fixed_abs, tag = 'smem constant byte address 0x4 - core index']
  #allocation1 [shape = 'u32[72,128]{1,0:T(1,128)}', space=vmem, size = 0x9000, scoped, tag = 'internal scratch']
  #allocation2 [shape = 'f32[8,128]{1,0:T(8,128)}', space=vmem, size = 0x1000, scoped, tag = 'scratch operand']
  #allocation3 [shape = 'f32[8,128]{1,0:T(8,128)}', space=vmem, size = 0x1000, scoped, tag = 'scratch operand']
  #allocation4 [shape = 'f32[8,8,512]{2,1,0:T(8,128)}', space=vmem, size = 0x20000, scoped, tag = 'scratch operand']
  #allocation5 [shape = 'f32[8,8,128]{2,1,0:T(8,128)}', space=vmem, size = 0x8000, scoped, tag = 'scratch operand']
  %s0 = inlined_call_operand.hbm [shape: f32[8,8,128], index: 0, kind: input, shape index: {}]
  %s1 = inlined_call_operand.hbm [shape: bf16[128,512], index: 1, kind: input, shape index: {}]
  %s2 = inlined_call_operand.hbm [shape: bf16[128,512], index: 2, kind: input, shape index: {}]
  %s3 = inlined_call_operand.hbm [shape: f32[1,512], index: 3, kind: input, shape index: {}]
  %s4 = inlined_call_operand.hbm [shape: bf16[128,128], index: 4, kind: input, shape index: {}]
  %s5 = inlined_call_operand.vmem [shape: f32[1,128], index: 5, kind: input, shape index: {}]
  %s6 = inlined_call_operand.hbm [shape: f32[8,128], index: 6, kind: input, shape index: {}]
  %s7 = inlined_call_operand.hbm [shape: f32[8,128], index: 7, kind: input, shape index: {}]
  %s8 = inlined_call_operand.hbm [shape: f32[8,8,128], index: 8, kind: output, shape index: {0}]
  %s9 = inlined_call_operand.hbm [shape: f32[8,128], index: 9, kind: output, shape index: {1}]
  %s10 = inlined_call_operand.hbm [shape: f32[8,128], index: 10, kind: output, shape index: {2}]
  %11 = xla_tuple %s8, %s9, %s10
  %s12 = sld [smem:[#allocation0]]
  $region94: #{tpu_custom_call.1} parent=0
    _
  %s14 = ssub.s32 1, %s12
  %s15 = scalar_select 0, %s14, %s12
  $region1: #{tpu_custom_call.1} parent=0
    #allocation6 [shape = 'u8[32768]{0}', space=vmem, size = 0x8000, scoped, tag = 'input window, operand 0, single buffered']
    #allocation7 [shape = 's32[1]{0}', space=sflag, size = 0x4, scoped, tag = 'scoped memory for tpu_custom_call.1']
    #allocation8 [shape = 's32[1]{0}', space=sflag, size = 0x4, scoped, tag = 'scoped memory for tpu_custom_call.1']
    #allocation9 [shape = 'u8[131072]{0}', space=vmem, size = 0x20000, scoped, tag = 'input window, operand 1, single buffered']
    #allocation10 [shape = 's32[1]{0}', space=sflag, size = 0x4, scoped, tag = 'scoped memory for tpu_custom_call.1']
    #allocation11 [shape = 'u8[131072]{0}', space=vmem, size = 0x20000, scoped, tag = 'input window, operand 2, single buffered']
    #allocation12 [shape = 'u8[2048]{0}', space=vmem, size = 0x800, scoped, tag = 'input window, operand 3, single buffered']
    #allocation13 [shape = 's32[1]{0}', space=sflag, size = 0x4, scoped, tag = 'scoped memory for tpu_custom_call.1']
    #allocation14 [shape = 'u8[32768]{0}', space=vmem, size = 0x8000, scoped, tag = 'input window, operand 4, single buffered']
    #allocation15 [shape = 'u8[4096]{0}', space=vmem, size = 0x1000, scoped, tag = 'input window, operand 6, single buffered']
    #allocation16 [shape = 's32[1]{0}', space=sflag, size = 0x4, scoped, tag = 'scoped memory for tpu_custom_call.1']
    #allocation17 [shape = 'u8[4096]{0}', space=vmem, size = 0x1000, scoped, tag = 'input window, operand 7, single buffered']
    #allocation18 [shape = 'u8[32768]{0}', space=vmem, size = 0x8000, scoped, tag = 'output window, operand 0, single buffered']
    #allocation19 [shape = 'u8[4096]{0}', space=vmem, size = 0x1000, scoped, tag = 'output window, operand 1, single buffered']
    #allocation20 [shape = 's32[1]{0}', space=sflag, size = 0x4, scoped, tag = 'scoped memory for tpu_custom_call.1']
    #allocation21 [shape = 'u8[4096]{0}', space=vmem, size = 0x1000, scoped, tag = 'output window, operand 2, single buffered']
    %16 = vsyncpa [#allocation7], 0
    %17 = vsyncpa [#allocation10], 0
    %18 = vsyncpa [#allocation13], 0
    %19 = vsyncpa [#allocation16], 0
    %20 = vsyncpa [#allocation8], 0
    %21 = vsyncpa [#allocation20], 0
    // Predicated region
    $region2: #{tpu_custom_call.1} parent=1 // pred_check
      _
    $region3: #{tpu_custom_call.1} parent=1 // pred_check_branch
      %23 = sbr.rel (0) target = $region5
    $region4: #{tpu_custom_call.1} parent=1 // pred_region
      %25 = vsyncadd [#allocation7], 0
      %s26 = sshll.u32 %s0, 4
      %s27 = int_to_ptr.hbm [resolvable:$true] %s26
      %s28 = sshll.u32 [#allocation6], 4
      %s29 = int_to_ptr.vmem [resolvable:$true] %s28
      %34 = dma.hbm_to_vmem [thread:$0]  %s27, 1024, %s29, [#allocation7], 128, 128, 8
    $region5: #{tpu_custom_call.1} parent=1 // pred_fallthru
      _
    // Predicated region
    $region6: #{tpu_custom_call.1} parent=1 // pred_check
      _
    $region7: #{tpu_custom_call.1} parent=1 // pred_check_branch
      %36 = sbr.rel (0) target = $region9
    $region8: #{tpu_custom_call.1} parent=1 // pred_region
      %38 = vsyncadd [#allocation10], 0
      %s39 = sshll.u32 %s1, 4
      %s40 = int_to_ptr.hbm [resolvable:$true] %s39
      %s41 = sshll.u32 [#allocation9], 4
      %s42 = int_to_ptr.vmem [resolvable:$true] %s41
      %47 = dma.hbm_to_vmem [thread:$0]  %s40, 4096, %s42, [#allocation10], 256, 256, 16
    $region9: #{tpu_custom_call.1} parent=1 // pred_fallthru
      _
    // Predicated region
    $region10: #{tpu_custom_call.1} parent=1 // pred_check
      _
    $region11: #{tpu_custom_call.1} parent=1 // pred_check_branch
      %49 = sbr.rel (0) target = $region13
    $region12: #{tpu_custom_call.1} parent=1 // pred_region
      %51 = vsyncadd [#allocation10], 0
      %s52 = sshll.u32 %s2, 4
      %s53 = int_to_ptr.hbm [resolvable:$true] %s52
      %s54 = sshll.u32 [#allocation11], 4
      %s55 = int_to_ptr.vmem [resolvable:$true] %s54
      %60 = dma.hbm_to_vmem [thread:$0]  %s53, 4096, %s55, [#allocation10], 256, 256, 16
    $region13: #{tpu_custom_call.1} parent=1 // pred_fallthru
      _
    // Predicated region
    $region14: #{tpu_custom_call.1} parent=1 // pred_check
      _
    $region15: #{tpu_custom_call.1} parent=1 // pred_check_branch
      %62 = sbr.rel (0) target = $region17
    $region16: #{tpu_custom_call.1} parent=1 // pred_region
      %64 = vsyncadd [#allocation13], 0
      %s66 = sshll.u32 %s3, 4
      %s67 = int_to_ptr.hbm [resolvable:$true] %s66
      %s68 = sshll.u32 [#allocation12], 4
      %s69 = int_to_ptr.vmem [resolvable:$true] %s68
      %71 = dma.hbm_to_vmem [thread:$0]  %s67, 64, %s69, [#allocation13]
    $region17: #{tpu_custom_call.1} parent=1 // pred_fallthru
      _
    // Predicated region
    $region18: #{tpu_custom_call.1} parent=1 // pred_check
      _
    $region19: #{tpu_custom_call.1} parent=1 // pred_check_branch
      %73 = sbr.rel (0) target = $region21
    $region20: #{tpu_custom_call.1} parent=1 // pred_region
      %75 = vsyncadd [#allocation13], 0
      %s76 = sshll.u32 %s4, 4
      %s77 = int_to_ptr.hbm [resolvable:$true] %s76
      %s78 = sshll.u32 [#allocation14], 4
      %s79 = int_to_ptr.vmem [resolvable:$true] %s78
      %84 = dma.hbm_to_vmem [thread:$0]  %s77, 1024, %s79, [#allocation13], 64, 64, 4
    $region21: #{tpu_custom_call.1} parent=1 // pred_fallthru
      _
    // Predicated region
    $region22: #{tpu_custom_call.1} parent=1 // pred_check
      _
    $region23: #{tpu_custom_call.1} parent=1 // pred_check_branch
      %86 = sbr.rel (0) target = $region25
    $region24: #{tpu_custom_call.1} parent=1 // pred_region
      _
    $region25: #{tpu_custom_call.1} parent=1 // pred_fallthru
      _
    // Predicated region
    $region26: #{tpu_custom_call.1} parent=1 // pred_check
      _
    $region27: #{tpu_custom_call.1} parent=1 // pred_check_branch
      %88 = sbr.rel (0) target = $region29
    $region28: #{tpu_custom_call.1} parent=1 // pred_region
      %90 = vsyncadd [#allocation16], 0
      %s92 = sshll.u32 %s6, 4
      %s93 = int_to_ptr.hbm [resolvable:$true] %s92
      %s94 = sshll.u32 [#allocation15], 4
      %s95 = int_to_ptr.vmem [resolvable:$true] %s94
      %97 = dma.hbm_to_vmem [thread:$0]  %s93, 128, %s95, [#allocation16]
    $region29: #{tpu_custom_call.1} parent=1 // pred_fallthru
      _
    // Predicated region
    $region30: #{tpu_custom_call.1} parent=1 // pred_check
      _
    $region31: #{tpu_custom_call.1} parent=1 // pred_check_branch
      %99 = sbr.rel (0) target = $region33
    $region32: #{tpu_custom_call.1} parent=1 // pred_region
      %101 = vsyncadd [#allocation16], 0
      %s103 = sshll.u32 %s7, 4
      %s104 = int_to_ptr.hbm [resolvable:$true] %s103
      %s105 = sshll.u32 [#allocation17], 4
      %s106 = int_to_ptr.vmem [resolvable:$true] %s105
      %108 = dma.hbm_to_vmem [thread:$0]  %s104, 128, %s106, [#allocation16]
    $region33: #{tpu_custom_call.1} parent=1 // pred_fallthru
      _
    // Predicated region
    $region34: #{tpu_custom_call.1} parent=1 // pred_check
      _
    $region35: #{tpu_custom_call.1} parent=1 // pred_check_branch
      %110 = sbr.rel (0) target = $region37
    $region36: #{tpu_custom_call.1} parent=1 // pred_region
      %112 = dma.done [#allocation7], 1024
    $region37: #{tpu_custom_call.1} parent=1 // pred_fallthru
      _
    // Predicated region
    $region38: #{tpu_custom_call.1} parent=1 // pred_check
      _
    $region39: #{tpu_custom_call.1} parent=1 // pred_check_branch
      %114 = sbr.rel (0) target = $region41
    $region40: #{tpu_custom_call.1} parent=1 // pred_region
      %116 = dma.done [#allocation10], 4096
    $region41: #{tpu_custom_call.1} parent=1 // pred_fallthru
      _
    // Predicated region
    $region42: #{tpu_custom_call.1} parent=1 // pred_check
      _
    $region43: #{tpu_custom_call.1} parent=1 // pred_check_branch
      %118 = sbr.rel (0) target = $region45
    $region44: #{tpu_custom_call.1} parent=1 // pred_region
      %120 = dma.done [#allocation10], 4096
    $region45: #{tpu_custom_call.1} parent=1 // pred_fallthru
      _
    // Predicated region
    $region46: #{tpu_custom_call.1} parent=1 // pred_check
      _
    $region47: #{tpu_custom_call.1} parent=1 // pred_check_branch
      %122 = sbr.rel (0) target = $region49
    $region48: #{tpu_custom_call.1} parent=1 // pred_region
      %124 = dma.done [#allocation13], 64
    $region49: #{tpu_custom_call.1} parent=1 // pred_fallthru
      _
    // Predicated region
    $region50: #{tpu_custom_call.1} parent=1 // pred_check
      _
    $region51: #{tpu_custom_call.1} parent=1 // pred_check_branch
      %126 = sbr.rel (0) target = $region53
    $region52: #{tpu_custom_call.1} parent=1 // pred_region
      %128 = dma.done [#allocation13], 1024
    $region53: #{tpu_custom_call.1} parent=1 // pred_fallthru
      _
    // Predicated region
    $region54: #{tpu_custom_call.1} parent=1 // pred_check
      _
    $region55: #{tpu_custom_call.1} parent=1 // pred_check_branch
      %130 = sbr.rel (0) target = $region57
    $region56: #{tpu_custom_call.1} parent=1 // pred_region
      %132 = dma.done [#allocation16], 128
    $region57: #{tpu_custom_call.1} parent=1 // pred_fallthru
      _
    // Predicated region
    $region58: #{tpu_custom_call.1} parent=1 // pred_check
      _
    $region59: #{tpu_custom_call.1} parent=1 // pred_check_branch
      %134 = sbr.rel (0) target = $region61
    $region60: #{tpu_custom_call.1} parent=1 // pred_region
      %136 = dma.done [#allocation16], 128
    $region61: #{tpu_custom_call.1} parent=1 // pred_fallthru
      _
    %p137 = scmp.eq.s32.totalorder 0, 0
    // Predicated region
    $region62: #{tpu_custom_call.1} parent=1 // pred_check
      %p138 = pneg %p137
    $region63: #{tpu_custom_call.1} parent=1 // pred_check_branch
      %140 = sbr.rel (%p138) target = $region65
    $region64: #{tpu_custom_call.1} parent=1 // pred_region
      %p141 = scmp.eq.s32.totalorder 0, 0
      // Predicated region
      $region66: #{tpu_custom_call.1} parent=64 // pred_check
        %p142 = pneg %p141
      $region67: #{tpu_custom_call.1} parent=64 // pred_check_branch
        %144 = sbr.rel (%p142) target = $region69
      $region68: #{tpu_custom_call.1} parent=64 // pred_region
        %v145 = vld [vmem:[#allocation15] sm:$0xff]
        %146 = vst [vmem:[#allocation2] sm:$0xff] %v145
        %v147 = vld [vmem:[#allocation17] sm:$0xff]
        %148 = vst [vmem:[#allocation3] sm:$0xff] %v147
      $region69: #{tpu_custom_call.1} parent=64 // pred_fallthru
        _
      %v149 = vld [vmem:[#allocation6] sm:$0xff]
      %v150 = vld [vmem:[#allocation6 + $0x8] sm:$0xff]
      %v151 = vld [vmem:[#allocation6 + $0x10] sm:$0xff]
      %v152 = vld [vmem:[#allocation6 + $0x18] sm:$0xff]
      %v153 = vld [vmem:[#allocation6 + $0x20] sm:$0xff]
      %v154 = vld [vmem:[#allocation6 + $0x28] sm:$0xff]
      %v155 = vld [vmem:[#allocation6 + $0x30] sm:$0xff]
      %v156 = vld [vmem:[#allocation6 + $0x38] sm:$0xff]
      %v157 = vpack.c.bf16 %v150, %v149
      %v158 = vpack.c.bf16 %v152, %v151
      %v159 = vpack.c.bf16 %v154, %v153
      %v160 = vpack.c.bf16 %v156, %v155
      %v161 = vld [vmem:[#allocation9] sm:$0xff]
      %v162 = vld [vmem:[#allocation9 + $0x8] sm:$0xff]
      %v163 = vld [vmem:[#allocation9 + $0x10] sm:$0xff]
      %v164 = vld [vmem:[#allocation9 + $0x18] sm:$0xff]
      %v165 = vld [vmem:[#allocation9 + $0x20] sm:$0xff]
      %v166 = vld [vmem:[#allocation9 + $0x28] sm:$0xff]
      %v167 = vld [vmem:[#allocation9 + $0x30] sm:$0xff]
      %v168 = vld [vmem:[#allocation9 + $0x38] sm:$0xff]
      %v169 = vld [vmem:[#allocation9 + $0x40] sm:$0xff]
      %v170 = vld [vmem:[#allocation9 + $0x48] sm:$0xff]
      %v171 = vld [vmem:[#allocation9 + $0x50] sm:$0xff]
      %v172 = vld [vmem:[#allocation9 + $0x58] sm:$0xff]
      %v173 = vld [vmem:[#allocation9 + $0x60] sm:$0xff]
      %v174 = vld [vmem:[#allocation9 + $0x68] sm:$0xff]
      %v175 = vld [vmem:[#allocation9 + $0x70] sm:$0xff]
      %v176 = vld [vmem:[#allocation9 + $0x78] sm:$0xff]
      %v177 = vld [vmem:[#allocation9 + $0x80] sm:$0xff]
      %v178 = vld [vmem:[#allocation9 + $0x88] sm:$0xff]
      %v179 = vld [vmem:[#allocation9 + $0x90] sm:$0xff]
      %v180 = vld [vmem:[#allocation9 + $0x98] sm:$0xff]
      %v181 = vld [vmem:[#allocation9 + $0xa0] sm:$0xff]
      %v182 = vld [vmem:[#allocation9 + $0xa8] sm:$0xff]
      %v183 = vld [vmem:[#allocation9 + $0xb0] sm:$0xff]
      %v184 = vld [vmem:[#allocation9 + $0xb8] sm:$0xff]
      %v185 = vld [vmem:[#allocation9 + $0xc0] sm:$0xff]
      %v186 = vld [vmem:[#allocation9 + $0xc8] sm:$0xff]
      %v187 = vld [vmem:[#allocation9 + $0xd0] sm:$0xff]
      %v188 = vld [vmem:[#allocation9 + $0xd8] sm:$0xff]
      %v189 = vld [vmem:[#allocation9 + $0xe0] sm:$0xff]
      %v190 = vld [vmem:[#allocation9 + $0xe8] sm:$0xff]
      %v191 = vld [vmem:[#allocation9 + $0xf0] sm:$0xff]
      %v192 = vld [vmem:[#allocation9 + $0xf8] sm:$0xff]
      %v193 = vld [vmem:[#allocation12] sm:$0xf]
      %v195 = vperm.slane %v193, 0
      %v196 = vperm.slane %v193, 1
      %v197 = vperm.slane %v193, 2
      %v198 = vperm.slane %v193, 3
      %v235 = vunpack.c.l.b16 %v161
      %v236 = vunpack.c.h.b16 %v161
      %v237 = vunpack.c.l.b16 %v162
      %v238 = vunpack.c.h.b16 %v162
      %v239 = vunpack.c.l.b16 %v163
      %v240 = vunpack.c.h.b16 %v163
      %v241 = vunpack.c.l.b16 %v164
      %v242 = vunpack.c.h.b16 %v164
      %v243 = vunpack.c.l.b16 %v165
      %v244 = vunpack.c.h.b16 %v165
      %v245 = vunpack.c.l.b16 %v166
      %v246 = vunpack.c.h.b16 %v166
      %v247 = vunpack.c.l.b16 %v167
      %v248 = vunpack.c.h.b16 %v167
      %v249 = vunpack.c.l.b16 %v168
      %v250 = vunpack.c.h.b16 %v168
      %v251 = vunpack.c.l.b16 %v169
      %v252 = vunpack.c.h.b16 %v169
      %v253 = vunpack.c.l.b16 %v170
      %v254 = vunpack.c.h.b16 %v170
      %v255 = vunpack.c.l.b16 %v171
      %v256 = vunpack.c.h.b16 %v171
      %v257 = vunpack.c.l.b16 %v172
      %v258 = vunpack.c.h.b16 %v172
      %v259 = vunpack.c.l.b16 %v173
      %v260 = vunpack.c.h.b16 %v173
      %v261 = vunpack.c.l.b16 %v174
      %v262 = vunpack.c.h.b16 %v174
      %v263 = vunpack.c.l.b16 %v175
      %v264 = vunpack.c.h.b16 %v175
      %v265 = vunpack.c.l.b16 %v176
      %v266 = vunpack.c.h.b16 %v176
      %v267 = vunpack.c.l.b16 %v177
      %v268 = vunpack.c.h.b16 %v177
      %v269 = vunpack.c.l.b16 %v178
      %v270 = vunpack.c.h.b16 %v178
      %v271 = vunpack.c.l.b16 %v179
      %v272 = vunpack.c.h.b16 %v179
      %v273 = vunpack.c.l.b16 %v180
      %v274 = vunpack.c.h.b16 %v180
      %v275 = vunpack.c.l.b16 %v181
      %v276 = vunpack.c.h.b16 %v181
      %v277 = vunpack.c.l.b16 %v182
      %v278 = vunpack.c.h.b16 %v182
      %v279 = vunpack.c.l.b16 %v183
      %v280 = vunpack.c.h.b16 %v183
      %v281 = vunpack.c.l.b16 %v184
      %v282 = vunpack.c.h.b16 %v184
      %v283 = vunpack.c.l.b16 %v185
      %v284 = vunpack.c.h.b16 %v185
      %v285 = vunpack.c.l.b16 %v186
      %v286 = vunpack.c.h.b16 %v186
      %v287 = vunpack.c.l.b16 %v187
      %v288 = vunpack.c.h.b16 %v187
      %v289 = vunpack.c.l.b16 %v188
      %v290 = vunpack.c.h.b16 %v188
      %v291 = vunpack.c.l.b16 %v189
      %v292 = vunpack.c.h.b16 %v189
      %v293 = vunpack.c.l.b16 %v190
      %v294 = vunpack.c.h.b16 %v190
      %v295 = vunpack.c.l.b16 %v191
      %v296 = vunpack.c.h.b16 %v191
      %v297 = vunpack.c.l.b16 %v192
      %v298 = vunpack.c.h.b16 %v192
      %v299 = vpack.c.b16 %v239, %v235
      %v300 = vpack.c.b16 %v240, %v236
      %v301 = vpack.c.b16 %v241, %v237
      %v302 = vpack.c.b16 %v242, %v238
      %v303 = vpack.c.b16 %v247, %v243
      %v304 = vpack.c.b16 %v248, %v244
      %v305 = vpack.c.b16 %v249, %v245
      %v306 = vpack.c.b16 %v250, %v246
      %v307 = vpack.c.b16 %v255, %v251
      %v308 = vpack.c.b16 %v256, %v252
      %v309 = vpack.c.b16 %v257, %v253
      %v310 = vpack.c.b16 %v258, %v254
      %v311 = vpack.c.b16 %v263, %v259
      %v312 = vpack.c.b16 %v264, %v260
      %v313 = vpack.c.b16 %v265, %v261
      %v314 = vpack.c.b16 %v266, %v262
      %v315 = vpack.c.b16 %v271, %v267
      %v316 = vpack.c.b16 %v272, %v268
      %v317 = vpack.c.b16 %v273, %v269
      %v318 = vpack.c.b16 %v274, %v270
      %v319 = vpack.c.b16 %v279, %v275
      %v320 = vpack.c.b16 %v280, %v276
      %v321 = vpack.c.b16 %v281, %v277
      %v322 = vpack.c.b16 %v282, %v278
      %v323 = vpack.c.b16 %v287, %v283
      %v324 = vpack.c.b16 %v288, %v284
      %v325 = vpack.c.b16 %v289, %v285
      %v326 = vpack.c.b16 %v290, %v286
      %v327 = vpack.c.b16 %v295, %v291
      %v328 = vpack.c.b16 %v296, %v292
      %v329 = vpack.c.b16 %v297, %v293
      %v330 = vpack.c.b16 %v298, %v294
      %363 = vmatpush.bf16.msra.mxu0 %v327
      %364 = vmatpush.bf16.msra.mxu0 %v323
      %365 = vmatpush.bf16.msra.mxu0 %v319
      %366 = vmatpush.bf16.msra.mxu0 %v315
      %367 = vmatpush.bf16.msra.mxu0 %v311
      %368 = vmatpush.bf16.msra.mxu0 %v307
      %369 = vmatpush.bf16.msra.mxu0 %v303
      %370 = vmatpush.bf16.msra.mxu0 %v299
      %371 = vmatmul.bf16.gmra.mxu0 %v157
      %v372 = vpop.f32.mrf.mxu0
      %v373 = vadd.f32 %v195, %v372
      %v374 = vpop.f32.mrf.mxu0
      %v375 = vadd.f32 %v195, %v374
      %376 = vmatmul.bf16.gmra.mxu0 %v158
      %v377 = vpop.f32.mrf.mxu0
      %v378 = vadd.f32 %v195, %v377
      %v379 = vpop.f32.mrf.mxu0
      %v380 = vadd.f32 %v195, %v379
      %381 = vmatmul.bf16.gmra.mxu0 %v159
      %v382 = vpop.f32.mrf.mxu0
      %v383 = vadd.f32 %v195, %v382
      %v384 = vpop.f32.mrf.mxu0
      %v385 = vadd.f32 %v195, %v384
      %386 = vmatmul.bf16.gmra.mxu0 %v160
      %v387 = vpop.f32.mrf.mxu0
      %v388 = vadd.f32 %v195, %v387
      %v389 = vpop.f32.mrf.mxu0
      %v390 = vadd.f32 %v195, %v389
      %391 = vdwg.mxu0
      %392 = vmatpush.bf16.msra.mxu0 %v328
      %393 = vmatpush.bf16.msra.mxu0 %v324
      %394 = vmatpush.bf16.msra.mxu0 %v320
      %395 = vmatpush.bf16.msra.mxu0 %v316
      %396 = vmatpush.bf16.msra.mxu0 %v312
      %397 = vmatpush.bf16.msra.mxu0 %v308
      %398 = vmatpush.bf16.msra.mxu0 %v304
      %399 = vmatpush.bf16.msra.mxu0 %v300
      %400 = vmatmul.bf16.gmra.mxu0 %v157
      %v401 = vpop.f32.mrf.mxu0
      %v402 = vadd.f32 %v196, %v401
      %v403 = vpop.f32.mrf.mxu0
      %v404 = vadd.f32 %v196, %v403
      %405 = vmatmul.bf16.gmra.mxu0 %v158
      %v406 = vpop.f32.mrf.mxu0
      %v407 = vadd.f32 %v196, %v406
      %v408 = vpop.f32.mrf.mxu0
      %v409 = vadd.f32 %v196, %v408
      %410 = vmatmul.bf16.gmra.mxu0 %v159
      %v411 = vpop.f32.mrf.mxu0
      %v412 = vadd.f32 %v196, %v411
      %v413 = vpop.f32.mrf.mxu0
      %v414 = vadd.f32 %v196, %v413
      %415 = vmatmul.bf16.gmra.mxu0 %v160
      %v416 = vpop.f32.mrf.mxu0
      %v417 = vadd.f32 %v196, %v416
      %v418 = vpop.f32.mrf.mxu0
      %v419 = vadd.f32 %v196, %v418
      %420 = vdwg.mxu0
      %421 = vmatpush.bf16.msra.mxu0 %v329
      %422 = vmatpush.bf16.msra.mxu0 %v325
      %423 = vmatpush.bf16.msra.mxu0 %v321
      %424 = vmatpush.bf16.msra.mxu0 %v317
      %425 = vmatpush.bf16.msra.mxu0 %v313
      %426 = vmatpush.bf16.msra.mxu0 %v309
      %427 = vmatpush.bf16.msra.mxu0 %v305
      %428 = vmatpush.bf16.msra.mxu0 %v301
      %429 = vmatmul.bf16.gmra.mxu0 %v157
      %v430 = vpop.f32.mrf.mxu0
      %v431 = vadd.f32 %v197, %v430
      %v432 = vpop.f32.mrf.mxu0
      %v433 = vadd.f32 %v197, %v432
      %434 = vmatmul.bf16.gmra.mxu0 %v158
      %v435 = vpop.f32.mrf.mxu0
      %v436 = vadd.f32 %v197, %v435
      %v437 = vpop.f32.mrf.mxu0
      %v438 = vadd.f32 %v197, %v437
      %439 = vmatmul.bf16.gmra.mxu0 %v159
      %v440 = vpop.f32.mrf.mxu0
      %v441 = vadd.f32 %v197, %v440
      %v442 = vpop.f32.mrf.mxu0
      %v443 = vadd.f32 %v197, %v442
      %444 = vmatmul.bf16.gmra.mxu0 %v160
      %v445 = vpop.f32.mrf.mxu0
      %v446 = vadd.f32 %v197, %v445
      %v447 = vpop.f32.mrf.mxu0
      %v448 = vadd.f32 %v197, %v447
      %449 = vdwg.mxu0
      %450 = vmatpush.bf16.msra.mxu0 %v330
      %451 = vmatpush.bf16.msra.mxu0 %v326
      %452 = vmatpush.bf16.msra.mxu0 %v322
      %453 = vmatpush.bf16.msra.mxu0 %v318
      %454 = vmatpush.bf16.msra.mxu0 %v314
      %455 = vmatpush.bf16.msra.mxu0 %v310
      %456 = vmatpush.bf16.msra.mxu0 %v306
      %457 = vmatpush.bf16.msra.mxu0 %v302
      %458 = vmatmul.bf16.gmra.mxu0 %v157
      %v459 = vpop.f32.mrf.mxu0
      %v460 = vadd.f32 %v198, %v459
      %v461 = vpop.f32.mrf.mxu0
      %v462 = vadd.f32 %v198, %v461
      %463 = vmatmul.bf16.gmra.mxu0 %v158
      %v464 = vpop.f32.mrf.mxu0
      %v465 = vadd.f32 %v198, %v464
      %v466 = vpop.f32.mrf.mxu0
      %v467 = vadd.f32 %v198, %v466
      %468 = vmatmul.bf16.gmra.mxu0 %v159
      %v469 = vpop.f32.mrf.mxu0
      %v470 = vadd.f32 %v198, %v469
      %v471 = vpop.f32.mrf.mxu0
      %v472 = vadd.f32 %v198, %v471
      %473 = vmatmul.bf16.gmra.mxu0 %v160
      %v474 = vpop.f32.mrf.mxu0
      %v475 = vadd.f32 %v198, %v474
      %v476 = vpop.f32.mrf.mxu0
      %v477 = vadd.f32 %v198, %v476
      %478 = vdwg.mxu0
      %479 = vst [vmem:[#allocation4] sm:$0xff] %v373
      %480 = vst [vmem:[#allocation4 + $0x8] sm:$0xff] %v402
      %481 = vst [vmem:[#allocation4 + $0x10] sm:$0xff] %v431
      %482 = vst [vmem:[#allocation4 + $0x18] sm:$0xff] %v460
      %483 = vst [vmem:[#allocation4 + $0x20] sm:$0xff] %v375
      %484 = vst [vmem:[#allocation4 + $0x28] sm:$0xff] %v404
      %485 = vst [vmem:[#allocation4 + $0x30] sm:$0xff] %v433
      %486 = vst [vmem:[#allocation4 + $0x38] sm:$0xff] %v462
      %487 = vst [vmem:[#allocation4 + $0x40] sm:$0xff] %v378
      %488 = vst [vmem:[#allocation4 + $0x48] sm:$0xff] %v407
      %489 = vst [vmem:[#allocation4 + $0x50] sm:$0xff] %v436
      %490 = vst [vmem:[#allocation4 + $0x58] sm:$0xff] %v465
      %491 = vst [vmem:[#allocation4 + $0x60] sm:$0xff] %v380
      %492 = vst [vmem:[#allocation4 + $0x68] sm:$0xff] %v409
      %493 = vst [vmem:[#allocation4 + $0x70] sm:$0xff] %v438
      %494 = vst [vmem:[#allocation4 + $0x78] sm:$0xff] %v467
      %495 = vst [vmem:[#allocation4 + $0x80] sm:$0xff] %v383
      %496 = vst [vmem:[#allocation4 + $0x88] sm:$0xff] %v412
      %497 = vst [vmem:[#allocation4 + $0x90] sm:$0xff] %v441
      %498 = vst [vmem:[#allocation4 + $0x98] sm:$0xff] %v470
      %499 = vst [vmem:[#allocation4 + $0xa0] sm:$0xff] %v385
      %500 = vst [vmem:[#allocation4 + $0xa8] sm:$0xff] %v414
      %501 = vst [vmem:[#allocation4 + $0xb0] sm:$0xff] %v443
      %502 = vst [vmem:[#allocation4 + $0xb8] sm:$0xff] %v472
      %503 = vst [vmem:[#allocation4 + $0xc0] sm:$0xff] %v388
      %504 = vst [vmem:[#allocation4 + $0xc8] sm:$0xff] %v417
      %505 = vst [vmem:[#allocation4 + $0xd0] sm:$0xff] %v446
      %506 = vst [vmem:[#allocation4 + $0xd8] sm:$0xff] %v475
      %507 = vst [vmem:[#allocation4 + $0xe0] sm:$0xff] %v390
      %508 = vst [vmem:[#allocation4 + $0xe8] sm:$0xff] %v419
      %509 = vst [vmem:[#allocation4 + $0xf0] sm:$0xff] %v448
      %510 = vst [vmem:[#allocation4 + $0xf8] sm:$0xff] %v477
      %v511 = vld [vmem:[#allocation11] sm:$0xff]
      %v512 = vld [vmem:[#allocation11 + $0x8] sm:$0xff]
      %v513 = vld [vmem:[#allocation11 + $0x10] sm:$0xff]
      %v514 = vld [vmem:[#allocation11 + $0x18] sm:$0xff]
      %v515 = vld [vmem:[#allocation11 + $0x20] sm:$0xff]
      %v516 = vld [vmem:[#allocation11 + $0x28] sm:$0xff]
      %v517 = vld [vmem:[#allocation11 + $0x30] sm:$0xff]
      %v518 = vld [vmem:[#allocation11 + $0x38] sm:$0xff]
      %v519 = vld [vmem:[#allocation11 + $0x40] sm:$0xff]
      %v520 = vld [vmem:[#allocation11 + $0x48] sm:$0xff]
      %v521 = vld [vmem:[#allocation11 + $0x50] sm:$0xff]
      %v522 = vld [vmem:[#allocation11 + $0x58] sm:$0xff]
      %v523 = vld [vmem:[#allocation11 + $0x60] sm:$0xff]
      %v524 = vld [vmem:[#allocation11 + $0x68] sm:$0xff]
      %v525 = vld [vmem:[#allocation11 + $0x70] sm:$0xff]
      %v526 = vld [vmem:[#allocation11 + $0x78] sm:$0xff]
      %v527 = vld [vmem:[#allocation11 + $0x80] sm:$0xff]
      %v528 = vld [vmem:[#allocation11 + $0x88] sm:$0xff]
      %v529 = vld [vmem:[#allocation11 + $0x90] sm:$0xff]
      %v530 = vld [vmem:[#allocation11 + $0x98] sm:$0xff]
      %v531 = vld [vmem:[#allocation11 + $0xa0] sm:$0xff]
      %v532 = vld [vmem:[#allocation11 + $0xa8] sm:$0xff]
      %v533 = vld [vmem:[#allocation11 + $0xb0] sm:$0xff]
      %v534 = vld [vmem:[#allocation11 + $0xb8] sm:$0xff]
      %v535 = vld [vmem:[#allocation11 + $0xc0] sm:$0xff]
      %v536 = vld [vmem:[#allocation11 + $0xc8] sm:$0xff]
      %v537 = vld [vmem:[#allocation11 + $0xd0] sm:$0xff]
      %v538 = vld [vmem:[#allocation11 + $0xd8] sm:$0xff]
      %v539 = vld [vmem:[#allocation11 + $0xe0] sm:$0xff]
      %v540 = vld [vmem:[#allocation11 + $0xe8] sm:$0xff]
      %v541 = vld [vmem:[#allocation11 + $0xf0] sm:$0xff]
      %v542 = vld [vmem:[#allocation11 + $0xf8] sm:$0xff]
      %v543 = vld [vmem:[#allocation2] sm:$0xff]
      %v544 = vld [vmem:[#allocation3] sm:$0xff]
      %v545 = vld [vmem:[#allocation4] sm:$0xff]
      %v546 = vld [vmem:[#allocation4 + $0x8] sm:$0xff]
      %v547 = vld [vmem:[#allocation4 + $0x10] sm:$0xff]
      %v548 = vld [vmem:[#allocation4 + $0x18] sm:$0xff]
      %v549 = vpack.c.bf16 %v543, %v543
      %v582 = vunpack.c.l.b16 %v511
      %v583 = vunpack.c.h.b16 %v511
      %v584 = vunpack.c.l.b16 %v512
      %v585 = vunpack.c.h.b16 %v512
      %v586 = vunpack.c.l.b16 %v513
      %v587 = vunpack.c.h.b16 %v513
      %v588 = vunpack.c.l.b16 %v514
      %v589 = vunpack.c.h.b16 %v514
      %v590 = vunpack.c.l.b16 %v515
      %v591 = vunpack.c.h.b16 %v515
      %v592 = vunpack.c.l.b16 %v516
      %v593 = vunpack.c.h.b16 %v516
      %v594 = vunpack.c.l.b16 %v517
      %v595 = vunpack.c.h.b16 %v517
      %v596 = vunpack.c.l.b16 %v518
      %v597 = vunpack.c.h.b16 %v518
      %v598 = vunpack.c.l.b16 %v519
      %v599 = vunpack.c.h.b16 %v519
      %v600 = vunpack.c.l.b16 %v520
      %v601 = vunpack.c.h.b16 %v520
      %v602 = vunpack.c.l.b16 %v521
      %v603 = vunpack.c.h.b16 %v521
      %v604 = vunpack.c.l.b16 %v522
      %v605 = vunpack.c.h.b16 %v522
      %v606 = vunpack.c.l.b16 %v523
      %v607 = vunpack.c.h.b16 %v523
      %v608 = vunpack.c.l.b16 %v524
      %v609 = vunpack.c.h.b16 %v524
      %v610 = vunpack.c.l.b16 %v525
      %v611 = vunpack.c.h.b16 %v525
      %v612 = vunpack.c.l.b16 %v526
      %v613 = vunpack.c.h.b16 %v526
      %v614 = vunpack.c.l.b16 %v527
      %v615 = vunpack.c.h.b16 %v527
      %v616 = vunpack.c.l.b16 %v528
      %v617 = vunpack.c.h.b16 %v528
      %v618 = vunpack.c.l.b16 %v529
      %v619 = vunpack.c.h.b16 %v529
      %v620 = vunpack.c.l.b16 %v530
      %v621 = vunpack.c.h.b16 %v530
      %v622 = vunpack.c.l.b16 %v531
      %v623 = vunpack.c.h.b16 %v531
      %v624 = vunpack.c.l.b16 %v532
      %v625 = vunpack.c.h.b16 %v532
      %v626 = vunpack.c.l.b16 %v533
      %v627 = vunpack.c.h.b16 %v533
      %v628 = vunpack.c.l.b16 %v534
      %v629 = vunpack.c.h.b16 %v534
      %v630 = vunpack.c.l.b16 %v535
      %v631 = vunpack.c.h.b16 %v535
      %v632 = vunpack.c.l.b16 %v536
      %v633 = vunpack.c.h.b16 %v536
      %v634 = vunpack.c.l.b16 %v537
      %v635 = vunpack.c.h.b16 %v537
      %v636 = vunpack.c.l.b16 %v538
      %v637 = vunpack.c.h.b16 %v538
      %v638 = vunpack.c.l.b16 %v539
      %v639 = vunpack.c.h.b16 %v539
      %v640 = vunpack.c.l.b16 %v540
      %v641 = vunpack.c.h.b16 %v540
      %v642 = vunpack.c.l.b16 %v541
      %v643 = vunpack.c.h.b16 %v541
      %v644 = vunpack.c.l.b16 %v542
      %v645 = vunpack.c.h.b16 %v542
      %v646 = vpack.c.b16 %v586, %v582
      %v647 = vpack.c.b16 %v587, %v583
      %v648 = vpack.c.b16 %v588, %v584
      %v649 = vpack.c.b16 %v589, %v585
      %v650 = vpack.c.b16 %v594, %v590
      %v651 = vpack.c.b16 %v595, %v591
      %v652 = vpack.c.b16 %v596, %v592
      %v653 = vpack.c.b16 %v597, %v593
      %v654 = vpack.c.b16 %v602, %v598
      %v655 = vpack.c.b16 %v603, %v599
      %v656 = vpack.c.b16 %v604, %v600
      %v657 = vpack.c.b16 %v605, %v601
      %v658 = vpack.c.b16 %v610, %v606
      %v659 = vpack.c.b16 %v611, %v607
      %v660 = vpack.c.b16 %v612, %v608
      %v661 = vpack.c.b16 %v613, %v609
      %v662 = vpack.c.b16 %v618, %v614
      %v663 = vpack.c.b16 %v619, %v615
      %v664 = vpack.c.b16 %v620, %v616
      %v665 = vpack.c.b16 %v621, %v617
      %v666 = vpack.c.b16 %v626, %v622
      %v667 = vpack.c.b16 %v627, %v623
      %v668 = vpack.c.b16 %v628, %v624
      %v669 = vpack.c.b16 %v629, %v625
      %v670 = vpack.c.b16 %v634, %v630
      %v671 = vpack.c.b16 %v635, %v631
      %v672 = vpack.c.b16 %v636, %v632
      %v673 = vpack.c.b16 %v637, %v633
      %v674 = vpack.c.b16 %v642, %v638
      %v675 = vpack.c.b16 %v643, %v639
      %v676 = vpack.c.b16 %v644, %v640
      %v677 = vpack.c.b16 %v645, %v641
      %710 = vmatpush.bf16.msra.mxu0 %v674
      %711 = vmatpush.bf16.msra.mxu0 %v670
      %712 = vmatpush.bf16.msra.mxu0 %v666
      %713 = vmatpush.bf16.msra.mxu0 %v662
      %714 = vmatpush.bf16.msra.mxu0 %v658
      %715 = vmatpush.bf16.msra.mxu0 %v654
      %716 = vmatpush.bf16.msra.mxu0 %v650
      %717 = vmatpush.bf16.msra.mxu0 %v646
      %718 = vmatmul.bf16.gmra.mxu0 %v549
      %v719 = vpop.f32.mrf.mxu0
      %v720 = vadd.f32 0.0, %v719
      %v721 = vpop.f32.mrf.mxu0
      %722 = vdwg.mxu0
      %723 = vmatpush.bf16.msra.mxu0 %v675
      %724 = vmatpush.bf16.msra.mxu0 %v671
      %725 = vmatpush.bf16.msra.mxu0 %v667
      %726 = vmatpush.bf16.msra.mxu0 %v663
      %727 = vmatpush.bf16.msra.mxu0 %v659
      %728 = vmatpush.bf16.msra.mxu0 %v655
      %729 = vmatpush.bf16.msra.mxu0 %v651
      %730 = vmatpush.bf16.msra.mxu0 %v647
      %731 = vmatmul.bf16.gmra.mxu0 %v549
      %v732 = vpop.f32.mrf.mxu0
      %v733 = vadd.f32 0.0, %v732
      %v734 = vpop.f32.mrf.mxu0
      %735 = vdwg.mxu0
      %736 = vmatpush.bf16.msra.mxu0 %v676
      %737 = vmatpush.bf16.msra.mxu0 %v672
      %738 = vmatpush.bf16.msra.mxu0 %v668
      %739 = vmatpush.bf16.msra.mxu0 %v664
      %740 = vmatpush.bf16.msra.mxu0 %v660
      %741 = vmatpush.bf16.msra.mxu0 %v656
      %742 = vmatpush.bf16.msra.mxu0 %v652
      %743 = vmatpush.bf16.msra.mxu0 %v648
      %744 = vmatmul.bf16.gmra.mxu0 %v549
      %v745 = vpop.f32.mrf.mxu0
      %v746 = vadd.f32 0.0, %v745
      %v747 = vpop.f32.mrf.mxu0
      %748 = vdwg.mxu0
      %749 = vmatpush.bf16.msra.mxu0 %v677
      %750 = vmatpush.bf16.msra.mxu0 %v673
      %751 = vmatpush.bf16.msra.mxu0 %v669
      %752 = vmatpush.bf16.msra.mxu0 %v665
      %753 = vmatpush.bf16.msra.mxu0 %v661
      %754 = vmatpush.bf16.msra.mxu0 %v657
      %755 = vmatpush.bf16.msra.mxu0 %v653
      %756 = vmatpush.bf16.msra.mxu0 %v649
      %757 = vmatmul.bf16.gmra.mxu0 %v549
      %v758 = vpop.f32.mrf.mxu0
      %v759 = vadd.f32 0.0, %v758
      %v760 = vpop.f32.mrf.mxu0
      %761 = vdwg.mxu0
      %v762 = vadd.f32 %v545, %v720
      %v763 = vadd.f32 %v546, %v733
      %v764 = vadd.f32 %v547, %v746
      %v765 = vadd.f32 %v548, %v759
      %v766 = vxor.u32 %v762, 2147483648
      %v767 = vmul.f32 %v766, 1.442695
      %v768 = vpow.pop %v767
      %v769 = vadd.f32 %v768, 1.0
      %v770 = vrcp.pop %v769
      %v771 = vmul.f32 %v769, %v770
      %v772 = vsub.f32 1.0, %v771
      %v773 = vmul.f32 %v770, %v772
      %v774 = vadd.f32 %v770, %v773
      %vm775 = vweird.f32 %v769
      %vm776 = vweird.f32 %v770
      %vm777 = vmor %vm775, %vm776
      %v778 = vsel %vm777, %v770, %v774
      %v779 = vand.u32 2147483647, %v769
      %vm780 = vcmp.eq.f32.partialorder %v779, 8.507059e+37
      %v781 = vand.u32 %v769, 2147483648
      %v782 = vor.u32 1.1754944e-38, %v781
      %v783 = vsel %vm780, %v782, %v778
      %v784 = vmul.f32 1.0, %v783
      %v785 = vxor.u32 %v763, 2147483648
      %v786 = vmul.f32 %v785, 1.442695
      %v787 = vpow.pop %v786
      %v788 = vadd.f32 %v787, 1.0
      %v789 = vrcp.pop %v788
      %v790 = vmul.f32 %v788, %v789
      %v791 = vsub.f32 1.0, %v790
      %v792 = vmul.f32 %v789, %v791
      %v793 = vadd.f32 %v789, %v792
      %vm794 = vweird.f32 %v788
      %vm795 = vweird.f32 %v789
      %vm796 = vmor %vm794, %vm795
      %v797 = vsel %vm796, %v789, %v793
      %v798 = vand.u32 2147483647, %v788
      %vm799 = vcmp.eq.f32.partialorder %v798, 8.507059e+37
      %v800 = vand.u32 %v788, 2147483648
      %v801 = vor.u32 1.1754944e-38, %v800
      %v802 = vsel %vm799, %v801, %v797
      %v803 = vmul.f32 1.0, %v802
      %v804 = vtanh.pop %v764
      %v805 = vxor.u32 %v765, 2147483648
      %v806 = vmul.f32 %v805, 1.442695
      %v807 = vpow.pop %v806
      %v808 = vadd.f32 %v807, 1.0
      %v809 = vrcp.pop %v808
      %v810 = vmul.f32 %v808, %v809
      %v811 = vsub.f32 1.0, %v810
      %v812 = vmul.f32 %v809, %v811
      %v813 = vadd.f32 %v809, %v812
      %vm814 = vweird.f32 %v808
      %vm815 = vweird.f32 %v809
      %vm816 = vmor %vm814, %vm815
      %v817 = vsel %vm816, %v809, %v813
      %v818 = vand.u32 2147483647, %v808
      %vm819 = vcmp.eq.f32.partialorder %v818, 8.507059e+37
      %v820 = vand.u32 %v808, 2147483648
      %v821 = vor.u32 1.1754944e-38, %v820
      %v822 = vsel %vm819, %v821, %v817
      %v823 = vmul.f32 1.0, %v822
      %v824 = vmul.f32 %v803, %v544
      %v825 = vmul.f32 %v784, %v804
      %v826 = vadd.f32 %v824, %v825
      %v827 = vtanh.pop %v826
      %v828 = vmul.f32 %v823, %v827
      %v830 = vrot.slane %v828, 1
      %v831 = vrot.slane %v828, 2
      %v832 = vrot.slane %v828, 3
      %v833 = vrot.slane %v828, 4
      %v834 = vrot.slane %v828, 5
      %v835 = vrot.slane %v828, 6
      %v836 = vrot.slane %v828, 7
      %844 = vst [vmem:[#allocation5] sm:$0x1] %v828
      %845 = vst [vmem:[#allocation5 + $0x8] sm:$0x1] %v830
      %846 = vst [vmem:[#allocation5 + $0x10] sm:$0x1] %v831
      %847 = vst [vmem:[#allocation5 + $0x18] sm:$0x1] %v832
      %848 = vst [vmem:[#allocation5 + $0x20] sm:$0x1] %v833
      %849 = vst [vmem:[#allocation5 + $0x28] sm:$0x1] %v834
      %850 = vst [vmem:[#allocation5 + $0x30] sm:$0x1] %v835
      %851 = vst [vmem:[#allocation5 + $0x38] sm:$0x1] %v836
      %s852 = scalar_lea.vmem [#allocation4], 32
      %v853 = vld [vmem:[%s852] sm:$0xff]
      %v854 = vld [vmem:[%s852 + $0x8] sm:$0xff]
      %v855 = vld [vmem:[%s852 + $0x10] sm:$0xff]
      %v856 = vld [vmem:[%s852 + $0x18] sm:$0xff]
      %v857 = vpack.c.bf16 %v828, %v828
      %858 = vmatpush.bf16.msra.mxu0 %v674
      %859 = vmatpush.bf16.msra.mxu0 %v670
      %860 = vmatpush.bf16.msra.mxu0 %v666
      %861 = vmatpush.bf16.msra.mxu0 %v662
      %862 = vmatpush.bf16.msra.mxu0 %v658
      %863 = vmatpush.bf16.msra.mxu0 %v654
      %864 = vmatpush.bf16.msra.mxu0 %v650
      %865 = vmatpush.bf16.msra.mxu0 %v646
      %866 = vmatmul.bf16.gmra.mxu0 %v857
      %v867 = vpop.f32.mrf.mxu0
      %v868 = vadd.f32 0.0, %v867
      %v869 = vpop.f32.mrf.mxu0
      %870 = vdwg.mxu0
      %871 = vmatpush.bf16.msra.mxu0 %v675
      %872 = vmatpush.bf16.msra.mxu0 %v671
      %873 = vmatpush.bf16.msra.mxu0 %v667
      %874 = vmatpush.bf16.msra.mxu0 %v663
      %875 = vmatpush.bf16.msra.mxu0 %v659
      %876 = vmatpush.bf16.msra.mxu0 %v655
      %877 = vmatpush.bf16.msra.mxu0 %v651
      %878 = vmatpush.bf16.msra.mxu0 %v647
      %879 = vmatmul.bf16.gmra.mxu0 %v857
      %v880 = vpop.f32.mrf.mxu0
      %v881 = vadd.f32 0.0, %v880
      %v882 = vpop.f32.mrf.mxu0
      %883 = vdwg.mxu0
      %884 = vmatpush.bf16.msra.mxu0 %v676
      %885 = vmatpush.bf16.msra.mxu0 %v672
      %886 = vmatpush.bf16.msra.mxu0 %v668
      %887 = vmatpush.bf16.msra.mxu0 %v664
      %888 = vmatpush.bf16.msra.mxu0 %v660
      %889 = vmatpush.bf16.msra.mxu0 %v656
      %890 = vmatpush.bf16.msra.mxu0 %v652
      %891 = vmatpush.bf16.msra.mxu0 %v648
      %892 = vmatmul.bf16.gmra.mxu0 %v857
      %v893 = vpop.f32.mrf.mxu0
      %v894 = vadd.f32 0.0, %v893
      %v895 = vpop.f32.mrf.mxu0
      %896 = vdwg.mxu0
      %897 = vmatpush.bf16.msra.mxu0 %v677
      %898 = vmatpush.bf16.msra.mxu0 %v673
      %899 = vmatpush.bf16.msra.mxu0 %v669
      %900 = vmatpush.bf16.msra.mxu0 %v665
      %901 = vmatpush.bf16.msra.mxu0 %v661
      %902 = vmatpush.bf16.msra.mxu0 %v657
      %903 = vmatpush.bf16.msra.mxu0 %v653
      %904 = vmatpush.bf16.msra.mxu0 %v649
      %905 = vmatmul.bf16.gmra.mxu0 %v857
      %v906 = vpop.f32.mrf.mxu0
      %v907 = vadd.f32 0.0, %v906
      %v908 = vpop.f32.mrf.mxu0
      %909 = vdwg.mxu0
      %v910 = vadd.f32 %v853, %v868
      %v911 = vadd.f32 %v854, %v881
      %v912 = vadd.f32 %v855, %v894
      %v913 = vadd.f32 %v856, %v907
      %v914 = vxor.u32 %v910, 2147483648
      %v915 = vmul.f32 %v914, 1.442695
      %v916 = vpow.pop %v915
      %v917 = vadd.f32 %v916, 1.0
      %v918 = vrcp.pop %v917
      %v919 = vmul.f32 %v917, %v918
      %v920 = vsub.f32 1.0, %v919
      %v921 = vmul.f32 %v918, %v920
      %v922 = vadd.f32 %v918, %v921
      %vm923 = vweird.f32 %v917
      %vm924 = vweird.f32 %v918
      %vm925 = vmor %vm923, %vm924
      %v926 = vsel %vm925, %v918, %v922
      %v927 = vand.u32 2147483647, %v917
      %vm928 = vcmp.eq.f32.partialorder %v927, 8.507059e+37
      %v929 = vand.u32 %v917, 2147483648
      %v930 = vor.u32 1.1754944e-38, %v929
      %v931 = vsel %vm928, %v930, %v926
      %v932 = vmul.f32 1.0, %v931
      %v933 = vxor.u32 %v911, 2147483648
      %v934 = vmul.f32 %v933, 1.442695
      %v935 = vpow.pop %v934
      %v936 = vadd.f32 %v935, 1.0
      %v937 = vrcp.pop %v936
      %v938 = vmul.f32 %v936, %v937
      %v939 = vsub.f32 1.0, %v938
      %v940 = vmul.f32 %v937, %v939
      %v941 = vadd.f32 %v937, %v940
      %vm942 = vweird.f32 %v936
      %vm943 = vweird.f32 %v937
      %vm944 = vmor %vm942, %vm943
      %v945 = vsel %vm944, %v937, %v941
      %v946 = vand.u32 2147483647, %v936
      %vm947 = vcmp.eq.f32.partialorder %v946, 8.507059e+37
      %v948 = vand.u32 %v936, 2147483648
      %v949 = vor.u32 1.1754944e-38, %v948
      %v950 = vsel %vm947, %v949, %v945
      %v951 = vmul.f32 1.0, %v950
      %v952 = vtanh.pop %v912
      %v953 = vxor.u32 %v913, 2147483648
      %v954 = vmul.f32 %v953, 1.442695
      %v955 = vpow.pop %v954
      %v956 = vadd.f32 %v955, 1.0
      %v957 = vrcp.pop %v956
      %v958 = vmul.f32 %v956, %v957
      %v959 = vsub.f32 1.0, %v958
      %v960 = vmul.f32 %v957, %v959
      %v961 = vadd.f32 %v957, %v960
      %vm962 = vweird.f32 %v956
      %vm963 = vweird.f32 %v957
      %vm964 = vmor %vm962, %vm963
      %v965 = vsel %vm964, %v957, %v961
      %v966 = vand.u32 2147483647, %v956
      %vm967 = vcmp.eq.f32.partialorder %v966, 8.507059e+37
      %v968 = vand.u32 %v956, 2147483648
      %v969 = vor.u32 1.1754944e-38, %v968
      %v970 = vsel %vm967, %v969, %v965
      %v971 = vmul.f32 1.0, %v970
      %v972 = vmul.f32 %v951, %v826
      %v973 = vmul.f32 %v932, %v952
      %v974 = vadd.f32 %v972, %v973
      %v975 = vtanh.pop %v974
      %v976 = vmul.f32 %v971, %v975
      %v978 = vrot.slane %v976, 1
      %v979 = vrot.slane %v976, 2
      %v980 = vrot.slane %v976, 3
      %v981 = vrot.slane %v976, 4
      %v982 = vrot.slane %v976, 5
      %v983 = vrot.slane %v976, 6
      %v984 = vrot.slane %v976, 7
      %992 = vst [vmem:[#allocation5 + $0x1] sm:$0x1] %v976
      %993 = vst [vmem:[#allocation5 + $0x9] sm:$0x1] %v978
      %994 = vst [vmem:[#allocation5 + $0x11] sm:$0x1] %v979
      %995 = vst [vmem:[#allocation5 + $0x19] sm:$0x1] %v980
      %996 = vst [vmem:[#allocation5 + $0x21] sm:$0x1] %v981
      %997 = vst [vmem:[#allocation5 + $0x29] sm:$0x1] %v982
      %998 = vst [vmem:[#allocation5 + $0x31] sm:$0x1] %v983
      %999 = vst [vmem:[#allocation5 + $0x39] sm:$0x1] %v984
      %s1000 = scalar_lea.vmem [#allocation4], 64
      %v1001 = vld [vmem:[%s1000] sm:$0xff]
      %v1002 = vld [vmem:[%s1000 + $0x8] sm:$0xff]
      %v1003 = vld [vmem:[%s1000 + $0x10] sm:$0xff]
      %v1004 = vld [vmem:[%s1000 + $0x18] sm:$0xff]
      %v1005 = vpack.c.bf16 %v976, %v976
      %1006 = vmatpush.bf16.msra.mxu0 %v674
      %1007 = vmatpush.bf16.msra.mxu0 %v670
      %1008 = vmatpush.bf16.msra.mxu0 %v666
      %1009 = vmatpush.bf16.msra.mxu0 %v662
      %1010 = vmatpush.bf16.msra.mxu0 %v658
      %1011 = vmatpush.bf16.msra.mxu0 %v654
      %1012 = vmatpush.bf16.msra.mxu0 %v650
      %1013 = vmatpush.bf16.msra.mxu0 %v646
      %1014 = vmatmul.bf16.gmra.mxu0 %v1005
      %v1015 = vpop.f32.mrf.mxu0
      %v1016 = vadd.f32 0.0, %v1015
      %v1017 = vpop.f32.mrf.mxu0
      %1018 = vdwg.mxu0
      %1019 = vmatpush.bf16.msra.mxu0 %v675
      %1020 = vmatpush.bf16.msra.mxu0 %v671
      %1021 = vmatpush.bf16.msra.mxu0 %v667
      %1022 = vmatpush.bf16.msra.mxu0 %v663
      %1023 = vmatpush.bf16.msra.mxu0 %v659
      %1024 = vmatpush.bf16.msra.mxu0 %v655
      %1025 = vmatpush.bf16.msra.mxu0 %v651
      %1026 = vmatpush.bf16.msra.mxu0 %v647
      %1027 = vmatmul.bf16.gmra.mxu0 %v1005
      %v1028 = vpop.f32.mrf.mxu0
      %v1029 = vadd.f32 0.0, %v1028
      %v1030 = vpop.f32.mrf.mxu0
      %1031 = vdwg.mxu0
      %1032 = vmatpush.bf16.msra.mxu0 %v676
      %1033 = vmatpush.bf16.msra.mxu0 %v672
      %1034 = vmatpush.bf16.msra.mxu0 %v668
      %1035 = vmatpush.bf16.msra.mxu0 %v664
      %1036 = vmatpush.bf16.msra.mxu0 %v660
      %1037 = vmatpush.bf16.msra.mxu0 %v656
      %1038 = vmatpush.bf16.msra.mxu0 %v652
      %1039 = vmatpush.bf16.msra.mxu0 %v648
      %1040 = vmatmul.bf16.gmra.mxu0 %v1005
      %v1041 = vpop.f32.mrf.mxu0
      %v1042 = vadd.f32 0.0, %v1041
      %v1043 = vpop.f32.mrf.mxu0
      %1044 = vdwg.mxu0
      %1045 = vmatpush.bf16.msra.mxu0 %v677
      %1046 = vmatpush.bf16.msra.mxu0 %v673
      %1047 = vmatpush.bf16.msra.mxu0 %v669
      %1048 = vmatpush.bf16.msra.mxu0 %v665
      %1049 = vmatpush.bf16.msra.mxu0 %v661
      %1050 = vmatpush.bf16.msra.mxu0 %v657
      %1051 = vmatpush.bf16.msra.mxu0 %v653
      %1052 = vmatpush.bf16.msra.mxu0 %v649
      %1053 = vmatmul.bf16.gmra.mxu0 %v1005
      %v1054 = vpop.f32.mrf.mxu0
      %v1055 = vadd.f32 0.0, %v1054
      %v1056 = vpop.f32.mrf.mxu0
      %1057 = vdwg.mxu0
      %v1058 = vadd.f32 %v1001, %v1016
      %v1059 = vadd.f32 %v1002, %v1029
      %v1060 = vadd.f32 %v1003, %v1042
      %v1061 = vadd.f32 %v1004, %v1055
      %v1062 = vxor.u32 %v1058, 2147483648
      %v1063 = vmul.f32 %v1062, 1.442695
      %v1064 = vpow.pop %v1063
      %v1065 = vadd.f32 %v1064, 1.0
      %v1066 = vrcp.pop %v1065
      %v1067 = vmul.f32 %v1065, %v1066
      %v1068 = vsub.f32 1.0, %v1067
      %v1069 = vmul.f32 %v1066, %v1068
      %v1070 = vadd.f32 %v1066, %v1069
      %vm1071 = vweird.f32 %v1065
      %vm1072 = vweird.f32 %v1066
      %vm1073 = vmor %vm1071, %vm1072
      %v1074 = vsel %vm1073, %v1066, %v1070
      %v1075 = vand.u32 2147483647, %v1065
      %vm1076 = vcmp.eq.f32.partialorder %v1075, 8.507059e+37
      %v1077 = vand.u32 %v1065, 2147483648
      %v1078 = vor.u32 1.1754944e-38, %v1077
      %v1079 = vsel %vm1076, %v1078, %v1074
      %v1080 = vmul.f32 1.0, %v1079
      %v1081 = vxor.u32 %v1059, 2147483648
      %v1082 = vmul.f32 %v1081, 1.442695
      %v1083 = vpow.pop %v1082
      %v1084 = vadd.f32 %v1083, 1.0
      %v1085 = vrcp.pop %v1084
      %v1086 = vmul.f32 %v1084, %v1085
      %v1087 = vsub.f32 1.0, %v1086
      %v1088 = vmul.f32 %v1085, %v1087
      %v1089 = vadd.f32 %v1085, %v1088
      %vm1090 = vweird.f32 %v1084
      %vm1091 = vweird.f32 %v1085
      %vm1092 = vmor %vm1090, %vm1091
      %v1093 = vsel %vm1092, %v1085, %v1089
      %v1094 = vand.u32 2147483647, %v1084
      %vm1095 = vcmp.eq.f32.partialorder %v1094, 8.507059e+37
      %v1096 = vand.u32 %v1084, 2147483648
      %v1097 = vor.u32 1.1754944e-38, %v1096
      %v1098 = vsel %vm1095, %v1097, %v1093
      %v1099 = vmul.f32 1.0, %v1098
      %v1100 = vtanh.pop %v1060
      %v1101 = vxor.u32 %v1061, 2147483648
      %v1102 = vmul.f32 %v1101, 1.442695
      %v1103 = vpow.pop %v1102
      %v1104 = vadd.f32 %v1103, 1.0
      %v1105 = vrcp.pop %v1104
      %v1106 = vmul.f32 %v1104, %v1105
      %v1107 = vsub.f32 1.0, %v1106
      %v1108 = vmul.f32 %v1105, %v1107
      %v1109 = vadd.f32 %v1105, %v1108
      %vm1110 = vweird.f32 %v1104
      %vm1111 = vweird.f32 %v1105
      %vm1112 = vmor %vm1110, %vm1111
      %v1113 = vsel %vm1112, %v1105, %v1109
      %v1114 = vand.u32 2147483647, %v1104
      %vm1115 = vcmp.eq.f32.partialorder %v1114, 8.507059e+37
      %v1116 = vand.u32 %v1104, 2147483648
      %v1117 = vor.u32 1.1754944e-38, %v1116
      %v1118 = vsel %vm1115, %v1117, %v1113
      %v1119 = vmul.f32 1.0, %v1118
      %v1120 = vmul.f32 %v1099, %v974
      %v1121 = vmul.f32 %v1080, %v1100
      %v1122 = vadd.f32 %v1120, %v1121
      %v1123 = vtanh.pop %v1122
      %v1124 = vmul.f32 %v1119, %v1123
      %v1126 = vrot.slane %v1124, 1
      %v1127 = vrot.slane %v1124, 2
      %v1128 = vrot.slane %v1124, 3
      %v1129 = vrot.slane %v1124, 4
      %v1130 = vrot.slane %v1124, 5
      %v1131 = vrot.slane %v1124, 6
      %v1132 = vrot.slane %v1124, 7
      %1140 = vst [vmem:[#allocation5 + $0x2] sm:$0x1] %v1124
      %1141 = vst [vmem:[#allocation5 + $0xa] sm:$0x1] %v1126
      %1142 = vst [vmem:[#allocation5 + $0x12] sm:$0x1] %v1127
      %1143 = vst [vmem:[#allocation5 + $0x1a] sm:$0x1] %v1128
      %1144 = vst [vmem:[#allocation5 + $0x22] sm:$0x1] %v1129
      %1145 = vst [vmem:[#allocation5 + $0x2a] sm:$0x1] %v1130
      %1146 = vst [vmem:[#allocation5 + $0x32] sm:$0x1] %v1131
      %1147 = vst [vmem:[#allocation5 + $0x3a] sm:$0x1] %v1132
      %s1148 = scalar_lea.vmem [#allocation4], 96
      %v1149 = vld [vmem:[%s1148] sm:$0xff]
      %v1150 = vld [vmem:[%s1148 + $0x8] sm:$0xff]
      %v1151 = vld [vmem:[%s1148 + $0x10] sm:$0xff]
      %v1152 = vld [vmem:[%s1148 + $0x18] sm:$0xff]
      %v1153 = vpack.c.bf16 %v1124, %v1124
      %1154 = vmatpush.bf16.msra.mxu0 %v674
      %1155 = vmatpush.bf16.msra.mxu0 %v670
      %1156 = vmatpush.bf16.msra.mxu0 %v666
      %1157 = vmatpush.bf16.msra.mxu0 %v662
      %1158 = vmatpush.bf16.msra.mxu0 %v658
      %1159 = vmatpush.bf16.msra.mxu0 %v654
      %1160 = vmatpush.bf16.msra.mxu0 %v650
      %1161 = vmatpush.bf16.msra.mxu0 %v646
      %1162 = vmatmul.bf16.gmra.mxu0 %v1153
      %v1163 = vpop.f32.mrf.mxu0
      %v1164 = vadd.f32 0.0, %v1163
      %v1165 = vpop.f32.mrf.mxu0
      %1166 = vdwg.mxu0
      %1167 = vmatpush.bf16.msra.mxu0 %v675
      %1168 = vmatpush.bf16.msra.mxu0 %v671
      %1169 = vmatpush.bf16.msra.mxu0 %v667
      %1170 = vmatpush.bf16.msra.mxu0 %v663
      %1171 = vmatpush.bf16.msra.mxu0 %v659
      %1172 = vmatpush.bf16.msra.mxu0 %v655
      %1173 = vmatpush.bf16.msra.mxu0 %v651
      %1174 = vmatpush.bf16.msra.mxu0 %v647
      %1175 = vmatmul.bf16.gmra.mxu0 %v1153
      %v1176 = vpop.f32.mrf.mxu0
      %v1177 = vadd.f32 0.0, %v1176
      %v1178 = vpop.f32.mrf.mxu0
      %1179 = vdwg.mxu0
      %1180 = vmatpush.bf16.msra.mxu0 %v676
      %1181 = vmatpush.bf16.msra.mxu0 %v672
      %1182 = vmatpush.bf16.msra.mxu0 %v668
      %1183 = vmatpush.bf16.msra.mxu0 %v664
      %1184 = vmatpush.bf16.msra.mxu0 %v660
      %1185 = vmatpush.bf16.msra.mxu0 %v656
      %1186 = vmatpush.bf16.msra.mxu0 %v652
      %1187 = vmatpush.bf16.msra.mxu0 %v648
      %1188 = vmatmul.bf16.gmra.mxu0 %v1153
      %v1189 = vpop.f32.mrf.mxu0
      %v1190 = vadd.f32 0.0, %v1189
      %v1191 = vpop.f32.mrf.mxu0
      %1192 = vdwg.mxu0
      %1193 = vmatpush.bf16.msra.mxu0 %v677
      %1194 = vmatpush.bf16.msra.mxu0 %v673
      %1195 = vmatpush.bf16.msra.mxu0 %v669
      %1196 = vmatpush.bf16.msra.mxu0 %v665
      %1197 = vmatpush.bf16.msra.mxu0 %v661
      %1198 = vmatpush.bf16.msra.mxu0 %v657
      %1199 = vmatpush.bf16.msra.mxu0 %v653
      %1200 = vmatpush.bf16.msra.mxu0 %v649
      %1201 = vmatmul.bf16.gmra.mxu0 %v1153
      %v1202 = vpop.f32.mrf.mxu0
      %v1203 = vadd.f32 0.0, %v1202
      %v1204 = vpop.f32.mrf.mxu0
      %1205 = vdwg.mxu0
      %v1206 = vadd.f32 %v1149, %v1164
      %v1207 = vadd.f32 %v1150, %v1177
      %v1208 = vadd.f32 %v1151, %v1190
      %v1209 = vadd.f32 %v1152, %v1203
      %v1210 = vxor.u32 %v1206, 2147483648
      %v1211 = vmul.f32 %v1210, 1.442695
      %v1212 = vpow.pop %v1211
      %v1213 = vadd.f32 %v1212, 1.0
      %v1214 = vrcp.pop %v1213
      %v1215 = vmul.f32 %v1213, %v1214
      %v1216 = vsub.f32 1.0, %v1215
      %v1217 = vmul.f32 %v1214, %v1216
      %v1218 = vadd.f32 %v1214, %v1217
      %vm1219 = vweird.f32 %v1213
      %vm1220 = vweird.f32 %v1214
      %vm1221 = vmor %vm1219, %vm1220
      %v1222 = vsel %vm1221, %v1214, %v1218
      %v1223 = vand.u32 2147483647, %v1213
      %vm1224 = vcmp.eq.f32.partialorder %v1223, 8.507059e+37
      %v1225 = vand.u32 %v1213, 2147483648
      %v1226 = vor.u32 1.1754944e-38, %v1225
      %v1227 = vsel %vm1224, %v1226, %v1222
      %v1228 = vmul.f32 1.0, %v1227
      %v1229 = vxor.u32 %v1207, 2147483648
      %v1230 = vmul.f32 %v1229, 1.442695
      %v1231 = vpow.pop %v1230
      %v1232 = vadd.f32 %v1231, 1.0
      %v1233 = vrcp.pop %v1232
      %v1234 = vmul.f32 %v1232, %v1233
      %v1235 = vsub.f32 1.0, %v1234
      %v1236 = vmul.f32 %v1233, %v1235
      %v1237 = vadd.f32 %v1233, %v1236
      %vm1238 = vweird.f32 %v1232
      %vm1239 = vweird.f32 %v1233
      %vm1240 = vmor %vm1238, %vm1239
      %v1241 = vsel %vm1240, %v1233, %v1237
      %v1242 = vand.u32 2147483647, %v1232
      %vm1243 = vcmp.eq.f32.partialorder %v1242, 8.507059e+37
      %v1244 = vand.u32 %v1232, 2147483648
      %v1245 = vor.u32 1.1754944e-38, %v1244
      %v1246 = vsel %vm1243, %v1245, %v1241
      %v1247 = vmul.f32 1.0, %v1246
      %v1248 = vtanh.pop %v1208
      %v1249 = vxor.u32 %v1209, 2147483648
      %v1250 = vmul.f32 %v1249, 1.442695
      %v1251 = vpow.pop %v1250
      %v1252 = vadd.f32 %v1251, 1.0
      %v1253 = vrcp.pop %v1252
      %v1254 = vmul.f32 %v1252, %v1253
      %v1255 = vsub.f32 1.0, %v1254
      %v1256 = vmul.f32 %v1253, %v1255
      %v1257 = vadd.f32 %v1253, %v1256
      %vm1258 = vweird.f32 %v1252
      %vm1259 = vweird.f32 %v1253
      %vm1260 = vmor %vm1258, %vm1259
      %v1261 = vsel %vm1260, %v1253, %v1257
      %v1262 = vand.u32 2147483647, %v1252
      %vm1263 = vcmp.eq.f32.partialorder %v1262, 8.507059e+37
      %v1264 = vand.u32 %v1252, 2147483648
      %v1265 = vor.u32 1.1754944e-38, %v1264
      %v1266 = vsel %vm1263, %v1265, %v1261
      %v1267 = vmul.f32 1.0, %v1266
      %v1268 = vmul.f32 %v1247, %v1122
      %v1269 = vmul.f32 %v1228, %v1248
      %v1270 = vadd.f32 %v1268, %v1269
      %v1271 = vtanh.pop %v1270
      %v1272 = vmul.f32 %v1267, %v1271
      %v1274 = vrot.slane %v1272, 1
      %v1275 = vrot.slane %v1272, 2
      %v1276 = vrot.slane %v1272, 3
      %v1277 = vrot.slane %v1272, 4
      %v1278 = vrot.slane %v1272, 5
      %v1279 = vrot.slane %v1272, 6
      %v1280 = vrot.slane %v1272, 7
      %1288 = vst [vmem:[#allocation5 + $0x3] sm:$0x1] %v1272
      %1289 = vst [vmem:[#allocation5 + $0xb] sm:$0x1] %v1274
      %1290 = vst [vmem:[#allocation5 + $0x13] sm:$0x1] %v1275
      %1291 = vst [vmem:[#allocation5 + $0x1b] sm:$0x1] %v1276
      %1292 = vst [vmem:[#allocation5 + $0x23] sm:$0x1] %v1277
      %1293 = vst [vmem:[#allocation5 + $0x2b] sm:$0x1] %v1278
      %1294 = vst [vmem:[#allocation5 + $0x33] sm:$0x1] %v1279
      %1295 = vst [vmem:[#allocation5 + $0x3b] sm:$0x1] %v1280
      %s1296 = scalar_lea.vmem [#allocation4], 128
      %v1297 = vld [vmem:[%s1296] sm:$0xff]
      %v1298 = vld [vmem:[%s1296 + $0x8] sm:$0xff]
      %v1299 = vld [vmem:[%s1296 + $0x10] sm:$0xff]
      %v1300 = vld [vmem:[%s1296 + $0x18] sm:$0xff]
      %v1301 = vpack.c.bf16 %v1272, %v1272
      %1302 = vmatpush.bf16.msra.mxu0 %v674
      %1303 = vmatpush.bf16.msra.mxu0 %v670
      %1304 = vmatpush.bf16.msra.mxu0 %v666
      %1305 = vmatpush.bf16.msra.mxu0 %v662
      %1306 = vmatpush.bf16.msra.mxu0 %v658
      %1307 = vmatpush.bf16.msra.mxu0 %v654
      %1308 = vmatpush.bf16.msra.mxu0 %v650
      %1309 = vmatpush.bf16.msra.mxu0 %v646
      %1310 = vmatmul.bf16.gmra.mxu0 %v1301
      %v1311 = vpop.f32.mrf.mxu0
      %v1312 = vadd.f32 0.0, %v1311
      %v1313 = vpop.f32.mrf.mxu0
      %1314 = vdwg.mxu0
      %1315 = vmatpush.bf16.msra.mxu0 %v675
      %1316 = vmatpush.bf16.msra.mxu0 %v671
      %1317 = vmatpush.bf16.msra.mxu0 %v667
      %1318 = vmatpush.bf16.msra.mxu0 %v663
      %1319 = vmatpush.bf16.msra.mxu0 %v659
      %1320 = vmatpush.bf16.msra.mxu0 %v655
      %1321 = vmatpush.bf16.msra.mxu0 %v651
      %1322 = vmatpush.bf16.msra.mxu0 %v647
      %1323 = vmatmul.bf16.gmra.mxu0 %v1301
      %v1324 = vpop.f32.mrf.mxu0
      %v1325 = vadd.f32 0.0, %v1324
      %v1326 = vpop.f32.mrf.mxu0
      %1327 = vdwg.mxu0
      %1328 = vmatpush.bf16.msra.mxu0 %v676
      %1329 = vmatpush.bf16.msra.mxu0 %v672
      %1330 = vmatpush.bf16.msra.mxu0 %v668
      %1331 = vmatpush.bf16.msra.mxu0 %v664
      %1332 = vmatpush.bf16.msra.mxu0 %v660
      %1333 = vmatpush.bf16.msra.mxu0 %v656
      %1334 = vmatpush.bf16.msra.mxu0 %v652
      %1335 = vmatpush.bf16.msra.mxu0 %v648
      %1336 = vmatmul.bf16.gmra.mxu0 %v1301
      %v1337 = vpop.f32.mrf.mxu0
      %v1338 = vadd.f32 0.0, %v1337
      %v1339 = vpop.f32.mrf.mxu0
      %1340 = vdwg.mxu0
      %1341 = vmatpush.bf16.msra.mxu0 %v677
      %1342 = vmatpush.bf16.msra.mxu0 %v673
      %1343 = vmatpush.bf16.msra.mxu0 %v669
      %1344 = vmatpush.bf16.msra.mxu0 %v665
      %1345 = vmatpush.bf16.msra.mxu0 %v661
      %1346 = vmatpush.bf16.msra.mxu0 %v657
      %1347 = vmatpush.bf16.msra.mxu0 %v653
      %1348 = vmatpush.bf16.msra.mxu0 %v649
      %1349 = vmatmul.bf16.gmra.mxu0 %v1301
      %v1350 = vpop.f32.mrf.mxu0
      %v1351 = vadd.f32 0.0, %v1350
      %v1352 = vpop.f32.mrf.mxu0
      %1353 = vdwg.mxu0
      %v1354 = vadd.f32 %v1297, %v1312
      %v1355 = vadd.f32 %v1298, %v1325
      %v1356 = vadd.f32 %v1299, %v1338
      %v1357 = vadd.f32 %v1300, %v1351
      %v1358 = vxor.u32 %v1354, 2147483648
      %v1359 = vmul.f32 %v1358, 1.442695
      %v1360 = vpow.pop %v1359
      %v1361 = vadd.f32 %v1360, 1.0
      %v1362 = vrcp.pop %v1361
      %v1363 = vmul.f32 %v1361, %v1362
      %v1364 = vsub.f32 1.0, %v1363
      %v1365 = vmul.f32 %v1362, %v1364
      %v1366 = vadd.f32 %v1362, %v1365
      %vm1367 = vweird.f32 %v1361
      %vm1368 = vweird.f32 %v1362
      %vm1369 = vmor %vm1367, %vm1368
      %v1370 = vsel %vm1369, %v1362, %v1366
      %v1371 = vand.u32 2147483647, %v1361
      %vm1372 = vcmp.eq.f32.partialorder %v1371, 8.507059e+37
      %v1373 = vand.u32 %v1361, 2147483648
      %v1374 = vor.u32 1.1754944e-38, %v1373
      %v1375 = vsel %vm1372, %v1374, %v1370
      %v1376 = vmul.f32 1.0, %v1375
      %v1377 = vxor.u32 %v1355, 2147483648
      %v1378 = vmul.f32 %v1377, 1.442695
      %v1379 = vpow.pop %v1378
      %v1380 = vadd.f32 %v1379, 1.0
      %v1381 = vrcp.pop %v1380
      %v1382 = vmul.f32 %v1380, %v1381
      %v1383 = vsub.f32 1.0, %v1382
      %v1384 = vmul.f32 %v1381, %v1383
      %v1385 = vadd.f32 %v1381, %v1384
      %vm1386 = vweird.f32 %v1380
      %vm1387 = vweird.f32 %v1381
      %vm1388 = vmor %vm1386, %vm1387
      %v1389 = vsel %vm1388, %v1381, %v1385
      %v1390 = vand.u32 2147483647, %v1380
      %vm1391 = vcmp.eq.f32.partialorder %v1390, 8.507059e+37
      %v1392 = vand.u32 %v1380, 2147483648
      %v1393 = vor.u32 1.1754944e-38, %v1392
      %v1394 = vsel %vm1391, %v1393, %v1389
      %v1395 = vmul.f32 1.0, %v1394
      %v1396 = vtanh.pop %v1356
      %v1397 = vxor.u32 %v1357, 2147483648
      %v1398 = vmul.f32 %v1397, 1.442695
      %v1399 = vpow.pop %v1398
      %v1400 = vadd.f32 %v1399, 1.0
      %v1401 = vrcp.pop %v1400
      %v1402 = vmul.f32 %v1400, %v1401
      %v1403 = vsub.f32 1.0, %v1402
      %v1404 = vmul.f32 %v1401, %v1403
      %v1405 = vadd.f32 %v1401, %v1404
      %vm1406 = vweird.f32 %v1400
      %vm1407 = vweird.f32 %v1401
      %vm1408 = vmor %vm1406, %vm1407
      %v1409 = vsel %vm1408, %v1401, %v1405
      %v1410 = vand.u32 2147483647, %v1400
      %vm1411 = vcmp.eq.f32.partialorder %v1410, 8.507059e+37
      %v1412 = vand.u32 %v1400, 2147483648
      %v1413 = vor.u32 1.1754944e-38, %v1412
      %v1414 = vsel %vm1411, %v1413, %v1409
      %v1415 = vmul.f32 1.0, %v1414
      %v1416 = vmul.f32 %v1395, %v1270
      %v1417 = vmul.f32 %v1376, %v1396
      %v1418 = vadd.f32 %v1416, %v1417
      %v1419 = vtanh.pop %v1418
      %v1420 = vmul.f32 %v1415, %v1419
      %v1422 = vrot.slane %v1420, 1
      %v1423 = vrot.slane %v1420, 2
      %v1424 = vrot.slane %v1420, 3
      %v1425 = vrot.slane %v1420, 4
      %v1426 = vrot.slane %v1420, 5
      %v1427 = vrot.slane %v1420, 6
      %v1428 = vrot.slane %v1420, 7
      %1436 = vst [vmem:[#allocation5 + $0x4] sm:$0x1] %v1420
      %1437 = vst [vmem:[#allocation5 + $0xc] sm:$0x1] %v1422
      %1438 = vst [vmem:[#allocation5 + $0x14] sm:$0x1] %v1423
      %1439 = vst [vmem:[#allocation5 + $0x1c] sm:$0x1] %v1424
      %1440 = vst [vmem:[#allocation5 + $0x24] sm:$0x1] %v1425
      %1441 = vst [vmem:[#allocation5 + $0x2c] sm:$0x1] %v1426
      %1442 = vst [vmem:[#allocation5 + $0x34] sm:$0x1] %v1427
      %1443 = vst [vmem:[#allocation5 + $0x3c] sm:$0x1] %v1428
      %s1444 = scalar_lea.vmem [#allocation4], 160
      %v1445 = vld [vmem:[%s1444] sm:$0xff]
      %v1446 = vld [vmem:[%s1444 + $0x8] sm:$0xff]
      %v1447 = vld [vmem:[%s1444 + $0x10] sm:$0xff]
      %v1448 = vld [vmem:[%s1444 + $0x18] sm:$0xff]
      %v1449 = vpack.c.bf16 %v1420, %v1420
      %1450 = vmatpush.bf16.msra.mxu0 %v674
      %1451 = vmatpush.bf16.msra.mxu0 %v670
      %1452 = vmatpush.bf16.msra.mxu0 %v666
      %1453 = vmatpush.bf16.msra.mxu0 %v662
      %1454 = vmatpush.bf16.msra.mxu0 %v658
      %1455 = vmatpush.bf16.msra.mxu0 %v654
      %1456 = vmatpush.bf16.msra.mxu0 %v650
      %1457 = vmatpush.bf16.msra.mxu0 %v646
      %1458 = vmatmul.bf16.gmra.mxu0 %v1449
      %v1459 = vpop.f32.mrf.mxu0
      %v1460 = vadd.f32 0.0, %v1459
      %v1461 = vpop.f32.mrf.mxu0
      %1462 = vdwg.mxu0
      %1463 = vmatpush.bf16.msra.mxu0 %v675
      %1464 = vmatpush.bf16.msra.mxu0 %v671
      %1465 = vmatpush.bf16.msra.mxu0 %v667
      %1466 = vmatpush.bf16.msra.mxu0 %v663
      %1467 = vmatpush.bf16.msra.mxu0 %v659
      %1468 = vmatpush.bf16.msra.mxu0 %v655
      %1469 = vmatpush.bf16.msra.mxu0 %v651
      %1470 = vmatpush.bf16.msra.mxu0 %v647
      %1471 = vmatmul.bf16.gmra.mxu0 %v1449
      %v1472 = vpop.f32.mrf.mxu0
      %v1473 = vadd.f32 0.0, %v1472
      %v1474 = vpop.f32.mrf.mxu0
      %1475 = vdwg.mxu0
      %1476 = vmatpush.bf16.msra.mxu0 %v676
      %1477 = vmatpush.bf16.msra.mxu0 %v672
      %1478 = vmatpush.bf16.msra.mxu0 %v668
      %1479 = vmatpush.bf16.msra.mxu0 %v664
      %1480 = vmatpush.bf16.msra.mxu0 %v660
      %1481 = vmatpush.bf16.msra.mxu0 %v656
      %1482 = vmatpush.bf16.msra.mxu0 %v652
      %1483 = vmatpush.bf16.msra.mxu0 %v648
      %1484 = vmatmul.bf16.gmra.mxu0 %v1449
      %v1485 = vpop.f32.mrf.mxu0
      %v1486 = vadd.f32 0.0, %v1485
      %v1487 = vpop.f32.mrf.mxu0
      %1488 = vdwg.mxu0
      %1489 = vmatpush.bf16.msra.mxu0 %v677
      %1490 = vmatpush.bf16.msra.mxu0 %v673
      %1491 = vmatpush.bf16.msra.mxu0 %v669
      %1492 = vmatpush.bf16.msra.mxu0 %v665
      %1493 = vmatpush.bf16.msra.mxu0 %v661
      %1494 = vmatpush.bf16.msra.mxu0 %v657
      %1495 = vmatpush.bf16.msra.mxu0 %v653
      %1496 = vmatpush.bf16.msra.mxu0 %v649
      %1497 = vmatmul.bf16.gmra.mxu0 %v1449
      %v1498 = vpop.f32.mrf.mxu0
      %v1499 = vadd.f32 0.0, %v1498
      %v1500 = vpop.f32.mrf.mxu0
      %1501 = vdwg.mxu0
      %v1502 = vadd.f32 %v1445, %v1460
      %v1503 = vadd.f32 %v1446, %v1473
      %v1504 = vadd.f32 %v1447, %v1486
      %v1505 = vadd.f32 %v1448, %v1499
      %v1506 = vxor.u32 %v1502, 2147483648
      %v1507 = vmul.f32 %v1506, 1.442695
      %v1508 = vpow.pop %v1507
      %v1509 = vadd.f32 %v1508, 1.0
      %v1510 = vrcp.pop %v1509
      %v1511 = vmul.f32 %v1509, %v1510
      %v1512 = vsub.f32 1.0, %v1511
      %v1513 = vmul.f32 %v1510, %v1512
      %v1514 = vadd.f32 %v1510, %v1513
      %vm1515 = vweird.f32 %v1509
      %vm1516 = vweird.f32 %v1510
      %vm1517 = vmor %vm1515, %vm1516
      %v1518 = vsel %vm1517, %v1510, %v1514
      %v1519 = vand.u32 2147483647, %v1509
      %vm1520 = vcmp.eq.f32.partialorder %v1519, 8.507059e+37
      %v1521 = vand.u32 %v1509, 2147483648
      %v1522 = vor.u32 1.1754944e-38, %v1521
      %v1523 = vsel %vm1520, %v1522, %v1518
      %v1524 = vmul.f32 1.0, %v1523
      %v1525 = vxor.u32 %v1503, 2147483648
      %v1526 = vmul.f32 %v1525, 1.442695
      %v1527 = vpow.pop %v1526
      %v1528 = vadd.f32 %v1527, 1.0
      %v1529 = vrcp.pop %v1528
      %v1530 = vmul.f32 %v1528, %v1529
      %v1531 = vsub.f32 1.0, %v1530
      %v1532 = vmul.f32 %v1529, %v1531
      %v1533 = vadd.f32 %v1529, %v1532
      %vm1534 = vweird.f32 %v1528
      %vm1535 = vweird.f32 %v1529
      %vm1536 = vmor %vm1534, %vm1535
      %v1537 = vsel %vm1536, %v1529, %v1533
      %v1538 = vand.u32 2147483647, %v1528
      %vm1539 = vcmp.eq.f32.partialorder %v1538, 8.507059e+37
      %v1540 = vand.u32 %v1528, 2147483648
      %v1541 = vor.u32 1.1754944e-38, %v1540
      %v1542 = vsel %vm1539, %v1541, %v1537
      %v1543 = vmul.f32 1.0, %v1542
      %v1544 = vtanh.pop %v1504
      %v1545 = vxor.u32 %v1505, 2147483648
      %v1546 = vmul.f32 %v1545, 1.442695
      %v1547 = vpow.pop %v1546
      %v1548 = vadd.f32 %v1547, 1.0
      %v1549 = vrcp.pop %v1548
      %v1550 = vmul.f32 %v1548, %v1549
      %v1551 = vsub.f32 1.0, %v1550
      %v1552 = vmul.f32 %v1549, %v1551
      %v1553 = vadd.f32 %v1549, %v1552
      %vm1554 = vweird.f32 %v1548
      %vm1555 = vweird.f32 %v1549
      %vm1556 = vmor %vm1554, %vm1555
      %v1557 = vsel %vm1556, %v1549, %v1553
      %v1558 = vand.u32 2147483647, %v1548
      %vm1559 = vcmp.eq.f32.partialorder %v1558, 8.507059e+37
      %v1560 = vand.u32 %v1548, 2147483648
      %v1561 = vor.u32 1.1754944e-38, %v1560
      %v1562 = vsel %vm1559, %v1561, %v1557
      %v1563 = vmul.f32 1.0, %v1562
      %v1564 = vmul.f32 %v1543, %v1418
      %v1565 = vmul.f32 %v1524, %v1544
      %v1566 = vadd.f32 %v1564, %v1565
      %v1567 = vtanh.pop %v1566
      %v1568 = vmul.f32 %v1563, %v1567
      %v1570 = vrot.slane %v1568, 1
      %v1571 = vrot.slane %v1568, 2
      %v1572 = vrot.slane %v1568, 3
      %v1573 = vrot.slane %v1568, 4
      %v1574 = vrot.slane %v1568, 5
      %v1575 = vrot.slane %v1568, 6
      %v1576 = vrot.slane %v1568, 7
      %1584 = vst [vmem:[#allocation5 + $0x5] sm:$0x1] %v1568
      %1585 = vst [vmem:[#allocation5 + $0xd] sm:$0x1] %v1570
      %1586 = vst [vmem:[#allocation5 + $0x15] sm:$0x1] %v1571
      %1587 = vst [vmem:[#allocation5 + $0x1d] sm:$0x1] %v1572
      %1588 = vst [vmem:[#allocation5 + $0x25] sm:$0x1] %v1573
      %1589 = vst [vmem:[#allocation5 + $0x2d] sm:$0x1] %v1574
      %1590 = vst [vmem:[#allocation5 + $0x35] sm:$0x1] %v1575
      %1591 = vst [vmem:[#allocation5 + $0x3d] sm:$0x1] %v1576
      %s1592 = scalar_lea.vmem [#allocation4], 192
      %v1593 = vld [vmem:[%s1592] sm:$0xff]
      %v1594 = vld [vmem:[%s1592 + $0x8] sm:$0xff]
      %v1595 = vld [vmem:[%s1592 + $0x10] sm:$0xff]
      %v1596 = vld [vmem:[%s1592 + $0x18] sm:$0xff]
      %v1597 = vpack.c.bf16 %v1568, %v1568
      %1598 = vmatpush.bf16.msra.mxu0 %v674
      %1599 = vmatpush.bf16.msra.mxu0 %v670
      %1600 = vmatpush.bf16.msra.mxu0 %v666
      %1601 = vmatpush.bf16.msra.mxu0 %v662
      %1602 = vmatpush.bf16.msra.mxu0 %v658
      %1603 = vmatpush.bf16.msra.mxu0 %v654
      %1604 = vmatpush.bf16.msra.mxu0 %v650
      %1605 = vmatpush.bf16.msra.mxu0 %v646
      %1606 = vmatmul.bf16.gmra.mxu0 %v1597
      %v1607 = vpop.f32.mrf.mxu0
      %v1608 = vadd.f32 0.0, %v1607
      %v1609 = vpop.f32.mrf.mxu0
      %1610 = vdwg.mxu0
      %1611 = vmatpush.bf16.msra.mxu0 %v675
      %1612 = vmatpush.bf16.msra.mxu0 %v671
      %1613 = vmatpush.bf16.msra.mxu0 %v667
      %1614 = vmatpush.bf16.msra.mxu0 %v663
      %1615 = vmatpush.bf16.msra.mxu0 %v659
      %1616 = vmatpush.bf16.msra.mxu0 %v655
      %1617 = vmatpush.bf16.msra.mxu0 %v651
      %1618 = vmatpush.bf16.msra.mxu0 %v647
      %1619 = vmatmul.bf16.gmra.mxu0 %v1597
      %v1620 = vpop.f32.mrf.mxu0
      %v1621 = vadd.f32 0.0, %v1620
      %v1622 = vpop.f32.mrf.mxu0
      %1623 = vdwg.mxu0
      %1624 = vmatpush.bf16.msra.mxu0 %v676
      %1625 = vmatpush.bf16.msra.mxu0 %v672
      %1626 = vmatpush.bf16.msra.mxu0 %v668
      %1627 = vmatpush.bf16.msra.mxu0 %v664
      %1628 = vmatpush.bf16.msra.mxu0 %v660
      %1629 = vmatpush.bf16.msra.mxu0 %v656
      %1630 = vmatpush.bf16.msra.mxu0 %v652
      %1631 = vmatpush.bf16.msra.mxu0 %v648
      %1632 = vmatmul.bf16.gmra.mxu0 %v1597
      %v1633 = vpop.f32.mrf.mxu0
      %v1634 = vadd.f32 0.0, %v1633
      %v1635 = vpop.f32.mrf.mxu0
      %1636 = vdwg.mxu0
      %1637 = vmatpush.bf16.msra.mxu0 %v677
      %1638 = vmatpush.bf16.msra.mxu0 %v673
      %1639 = vmatpush.bf16.msra.mxu0 %v669
      %1640 = vmatpush.bf16.msra.mxu0 %v665
      %1641 = vmatpush.bf16.msra.mxu0 %v661
      %1642 = vmatpush.bf16.msra.mxu0 %v657
      %1643 = vmatpush.bf16.msra.mxu0 %v653
      %1644 = vmatpush.bf16.msra.mxu0 %v649
      %1645 = vmatmul.bf16.gmra.mxu0 %v1597
      %v1646 = vpop.f32.mrf.mxu0
      %v1647 = vadd.f32 0.0, %v1646
      %v1648 = vpop.f32.mrf.mxu0
      %1649 = vdwg.mxu0
      %v1650 = vadd.f32 %v1593, %v1608
      %v1651 = vadd.f32 %v1594, %v1621
      %v1652 = vadd.f32 %v1595, %v1634
      %v1653 = vadd.f32 %v1596, %v1647
      %v1654 = vxor.u32 %v1650, 2147483648
      %v1655 = vmul.f32 %v1654, 1.442695
      %v1656 = vpow.pop %v1655
      %v1657 = vadd.f32 %v1656, 1.0
      %v1658 = vrcp.pop %v1657
      %v1659 = vmul.f32 %v1657, %v1658
      %v1660 = vsub.f32 1.0, %v1659
      %v1661 = vmul.f32 %v1658, %v1660
      %v1662 = vadd.f32 %v1658, %v1661
      %vm1663 = vweird.f32 %v1657
      %vm1664 = vweird.f32 %v1658
      %vm1665 = vmor %vm1663, %vm1664
      %v1666 = vsel %vm1665, %v1658, %v1662
      %v1667 = vand.u32 2147483647, %v1657
      %vm1668 = vcmp.eq.f32.partialorder %v1667, 8.507059e+37
      %v1669 = vand.u32 %v1657, 2147483648
      %v1670 = vor.u32 1.1754944e-38, %v1669
      %v1671 = vsel %vm1668, %v1670, %v1666
      %v1672 = vmul.f32 1.0, %v1671
      %v1673 = vxor.u32 %v1651, 2147483648
      %v1674 = vmul.f32 %v1673, 1.442695
      %v1675 = vpow.pop %v1674
      %v1676 = vadd.f32 %v1675, 1.0
      %v1677 = vrcp.pop %v1676
      %v1678 = vmul.f32 %v1676, %v1677
      %v1679 = vsub.f32 1.0, %v1678
      %v1680 = vmul.f32 %v1677, %v1679
      %v1681 = vadd.f32 %v1677, %v1680
      %vm1682 = vweird.f32 %v1676
      %vm1683 = vweird.f32 %v1677
      %vm1684 = vmor %vm1682, %vm1683
      %v1685 = vsel %vm1684, %v1677, %v1681
      %v1686 = vand.u32 2147483647, %v1676
      %vm1687 = vcmp.eq.f32.partialorder %v1686, 8.507059e+37
      %v1688 = vand.u32 %v1676, 2147483648
      %v1689 = vor.u32 1.1754944e-38, %v1688
      %v1690 = vsel %vm1687, %v1689, %v1685
      %v1691 = vmul.f32 1.0, %v1690
      %v1692 = vtanh.pop %v1652
      %v1693 = vxor.u32 %v1653, 2147483648
      %v1694 = vmul.f32 %v1693, 1.442695
      %v1695 = vpow.pop %v1694
      %v1696 = vadd.f32 %v1695, 1.0
      %v1697 = vrcp.pop %v1696
      %v1698 = vmul.f32 %v1696, %v1697
      %v1699 = vsub.f32 1.0, %v1698
      %v1700 = vmul.f32 %v1697, %v1699
      %v1701 = vadd.f32 %v1697, %v1700
      %vm1702 = vweird.f32 %v1696
      %vm1703 = vweird.f32 %v1697
      %vm1704 = vmor %vm1702, %vm1703
      %v1705 = vsel %vm1704, %v1697, %v1701
      %v1706 = vand.u32 2147483647, %v1696
      %vm1707 = vcmp.eq.f32.partialorder %v1706, 8.507059e+37
      %v1708 = vand.u32 %v1696, 2147483648
      %v1709 = vor.u32 1.1754944e-38, %v1708
      %v1710 = vsel %vm1707, %v1709, %v1705
      %v1711 = vmul.f32 1.0, %v1710
      %v1712 = vmul.f32 %v1691, %v1566
      %v1713 = vmul.f32 %v1672, %v1692
      %v1714 = vadd.f32 %v1712, %v1713
      %v1715 = vtanh.pop %v1714
      %v1716 = vmul.f32 %v1711, %v1715
      %v1718 = vrot.slane %v1716, 1
      %v1719 = vrot.slane %v1716, 2
      %v1720 = vrot.slane %v1716, 3
      %v1721 = vrot.slane %v1716, 4
      %v1722 = vrot.slane %v1716, 5
      %v1723 = vrot.slane %v1716, 6
      %v1724 = vrot.slane %v1716, 7
      %1732 = vst [vmem:[#allocation5 + $0x6] sm:$0x1] %v1716
      %1733 = vst [vmem:[#allocation5 + $0xe] sm:$0x1] %v1718
      %1734 = vst [vmem:[#allocation5 + $0x16] sm:$0x1] %v1719
      %1735 = vst [vmem:[#allocation5 + $0x1e] sm:$0x1] %v1720
      %1736 = vst [vmem:[#allocation5 + $0x26] sm:$0x1] %v1721
      %1737 = vst [vmem:[#allocation5 + $0x2e] sm:$0x1] %v1722
      %1738 = vst [vmem:[#allocation5 + $0x36] sm:$0x1] %v1723
      %1739 = vst [vmem:[#allocation5 + $0x3e] sm:$0x1] %v1724
      %s1740 = scalar_lea.vmem [#allocation4], 224
      %v1741 = vld [vmem:[%s1740] sm:$0xff]
      %v1742 = vld [vmem:[%s1740 + $0x8] sm:$0xff]
      %v1743 = vld [vmem:[%s1740 + $0x10] sm:$0xff]
      %v1744 = vld [vmem:[%s1740 + $0x18] sm:$0xff]
      %v1745 = vpack.c.bf16 %v1716, %v1716
      %1746 = vmatpush.bf16.msra.mxu0 %v674
      %1747 = vmatpush.bf16.msra.mxu0 %v670
      %1748 = vmatpush.bf16.msra.mxu0 %v666
      %1749 = vmatpush.bf16.msra.mxu0 %v662
      %1750 = vmatpush.bf16.msra.mxu0 %v658
      %1751 = vmatpush.bf16.msra.mxu0 %v654
      %1752 = vmatpush.bf16.msra.mxu0 %v650
      %1753 = vmatpush.bf16.msra.mxu0 %v646
      %1754 = vmatmul.bf16.gmra.mxu0 %v1745
      %v1755 = vpop.f32.mrf.mxu0
      %v1756 = vadd.f32 0.0, %v1755
      %v1757 = vpop.f32.mrf.mxu0
      %1758 = vdwg.mxu0
      %1759 = vmatpush.bf16.msra.mxu0 %v675
      %1760 = vmatpush.bf16.msra.mxu0 %v671
      %1761 = vmatpush.bf16.msra.mxu0 %v667
      %1762 = vmatpush.bf16.msra.mxu0 %v663
      %1763 = vmatpush.bf16.msra.mxu0 %v659
      %1764 = vmatpush.bf16.msra.mxu0 %v655
      %1765 = vmatpush.bf16.msra.mxu0 %v651
      %1766 = vmatpush.bf16.msra.mxu0 %v647
      %1767 = vmatmul.bf16.gmra.mxu0 %v1745
      %v1768 = vpop.f32.mrf.mxu0
      %v1769 = vadd.f32 0.0, %v1768
      %v1770 = vpop.f32.mrf.mxu0
      %1771 = vdwg.mxu0
      %1772 = vmatpush.bf16.msra.mxu0 %v676
      %1773 = vmatpush.bf16.msra.mxu0 %v672
      %1774 = vmatpush.bf16.msra.mxu0 %v668
      %1775 = vmatpush.bf16.msra.mxu0 %v664
      %1776 = vmatpush.bf16.msra.mxu0 %v660
      %1777 = vmatpush.bf16.msra.mxu0 %v656
      %1778 = vmatpush.bf16.msra.mxu0 %v652
      %1779 = vmatpush.bf16.msra.mxu0 %v648
      %1780 = vmatmul.bf16.gmra.mxu0 %v1745
      %v1781 = vpop.f32.mrf.mxu0
      %v1782 = vadd.f32 0.0, %v1781
      %v1783 = vpop.f32.mrf.mxu0
      %1784 = vdwg.mxu0
      %1785 = vmatpush.bf16.msra.mxu0 %v677
      %1786 = vmatpush.bf16.msra.mxu0 %v673
      %1787 = vmatpush.bf16.msra.mxu0 %v669
      %1788 = vmatpush.bf16.msra.mxu0 %v665
      %1789 = vmatpush.bf16.msra.mxu0 %v661
      %1790 = vmatpush.bf16.msra.mxu0 %v657
      %1791 = vmatpush.bf16.msra.mxu0 %v653
      %1792 = vmatpush.bf16.msra.mxu0 %v649
      %1793 = vmatmul.bf16.gmra.mxu0 %v1745
      %v1794 = vpop.f32.mrf.mxu0
      %v1795 = vadd.f32 0.0, %v1794
      %v1796 = vpop.f32.mrf.mxu0
      %1797 = vdwg.mxu0
      %v1798 = vadd.f32 %v1741, %v1756
      %v1799 = vadd.f32 %v1742, %v1769
      %v1800 = vadd.f32 %v1743, %v1782
      %v1801 = vadd.f32 %v1744, %v1795
      %v1802 = vxor.u32 %v1798, 2147483648
      %v1803 = vmul.f32 %v1802, 1.442695
      %v1804 = vpow.pop %v1803
      %v1805 = vadd.f32 %v1804, 1.0
      %v1806 = vrcp.pop %v1805
      %v1807 = vmul.f32 %v1805, %v1806
      %v1808 = vsub.f32 1.0, %v1807
      %v1809 = vmul.f32 %v1806, %v1808
      %v1810 = vadd.f32 %v1806, %v1809
      %vm1811 = vweird.f32 %v1805
      %vm1812 = vweird.f32 %v1806
      %vm1813 = vmor %vm1811, %vm1812
      %v1814 = vsel %vm1813, %v1806, %v1810
      %v1815 = vand.u32 2147483647, %v1805
      %vm1816 = vcmp.eq.f32.partialorder %v1815, 8.507059e+37
      %v1817 = vand.u32 %v1805, 2147483648
      %v1818 = vor.u32 1.1754944e-38, %v1817
      %v1819 = vsel %vm1816, %v1818, %v1814
      %v1820 = vmul.f32 1.0, %v1819
      %v1821 = vxor.u32 %v1799, 2147483648
      %v1822 = vmul.f32 %v1821, 1.442695
      %v1823 = vpow.pop %v1822
      %v1824 = vadd.f32 %v1823, 1.0
      %v1825 = vrcp.pop %v1824
      %v1826 = vmul.f32 %v1824, %v1825
      %v1827 = vsub.f32 1.0, %v1826
      %v1828 = vmul.f32 %v1825, %v1827
      %v1829 = vadd.f32 %v1825, %v1828
      %vm1830 = vweird.f32 %v1824
      %vm1831 = vweird.f32 %v1825
      %vm1832 = vmor %vm1830, %vm1831
      %v1833 = vsel %vm1832, %v1825, %v1829
      %v1834 = vand.u32 2147483647, %v1824
      %vm1835 = vcmp.eq.f32.partialorder %v1834, 8.507059e+37
      %v1836 = vand.u32 %v1824, 2147483648
      %v1837 = vor.u32 1.1754944e-38, %v1836
      %v1838 = vsel %vm1835, %v1837, %v1833
      %v1839 = vmul.f32 1.0, %v1838
      %v1840 = vtanh.pop %v1800
      %v1841 = vxor.u32 %v1801, 2147483648
      %v1842 = vmul.f32 %v1841, 1.442695
      %v1843 = vpow.pop %v1842
      %v1844 = vadd.f32 %v1843, 1.0
      %v1845 = vrcp.pop %v1844
      %v1846 = vmul.f32 %v1844, %v1845
      %v1847 = vsub.f32 1.0, %v1846
      %v1848 = vmul.f32 %v1845, %v1847
      %v1849 = vadd.f32 %v1845, %v1848
      %vm1850 = vweird.f32 %v1844
      %vm1851 = vweird.f32 %v1845
      %vm1852 = vmor %vm1850, %vm1851
      %v1853 = vsel %vm1852, %v1845, %v1849
      %v1854 = vand.u32 2147483647, %v1844
      %vm1855 = vcmp.eq.f32.partialorder %v1854, 8.507059e+37
      %v1856 = vand.u32 %v1844, 2147483648
      %v1857 = vor.u32 1.1754944e-38, %v1856
      %v1858 = vsel %vm1855, %v1857, %v1853
      %v1859 = vmul.f32 1.0, %v1858
      %v1860 = vmul.f32 %v1839, %v1714
      %v1861 = vmul.f32 %v1820, %v1840
      %v1862 = vadd.f32 %v1860, %v1861
      %v1863 = vtanh.pop %v1862
      %v1864 = vmul.f32 %v1859, %v1863
      %v1866 = vrot.slane %v1864, 1
      %v1867 = vrot.slane %v1864, 2
      %v1868 = vrot.slane %v1864, 3
      %v1869 = vrot.slane %v1864, 4
      %v1870 = vrot.slane %v1864, 5
      %v1871 = vrot.slane %v1864, 6
      %v1872 = vrot.slane %v1864, 7
      %1880 = vst [vmem:[#allocation5 + $0x7] sm:$0x1] %v1864
      %1881 = vst [vmem:[#allocation5 + $0xf] sm:$0x1] %v1866
      %1882 = vst [vmem:[#allocation5 + $0x17] sm:$0x1] %v1867
      %1883 = vst [vmem:[#allocation5 + $0x1f] sm:$0x1] %v1868
      %1884 = vst [vmem:[#allocation5 + $0x27] sm:$0x1] %v1869
      %1885 = vst [vmem:[#allocation5 + $0x2f] sm:$0x1] %v1870
      %1886 = vst [vmem:[#allocation5 + $0x37] sm:$0x1] %v1871
      %1887 = vst [vmem:[#allocation5 + $0x3f] sm:$0x1] %v1872
      %1888 = vst [vmem:[#allocation2] sm:$0xff] %v1864
      %1889 = vst [vmem:[#allocation3] sm:$0xff] %v1862
    $region65: #{tpu_custom_call.1} parent=1 // pred_fallthru
      _
    %v1890 = vld [vmem:[#allocation2] sm:$0xff]
    %1891 = vst [vmem:[#allocation19] sm:$0xff] %v1890
    %v1892 = vld [vmem:[#allocation3] sm:$0xff]
    %1893 = vst [vmem:[#allocation21] sm:$0xff] %v1892
    %v1894 = vld [vmem:[#allocation5] sm:$0xff]
    %v1895 = vld [vmem:[#allocation5 + $0x8] sm:$0xff]
    %v1896 = vld [vmem:[#allocation5 + $0x10] sm:$0xff]
    %v1897 = vld [vmem:[#allocation5 + $0x18] sm:$0xff]
    %v1898 = vld [vmem:[#allocation5 + $0x20] sm:$0xff]
    %v1899 = vld [vmem:[#allocation5 + $0x28] sm:$0xff]
    %v1900 = vld [vmem:[#allocation5 + $0x30] sm:$0xff]
    %v1901 = vld [vmem:[#allocation5 + $0x38] sm:$0xff]
    %v1902 = vpack.c.bf16 %v1895, %v1894
    %v1903 = vpack.c.bf16 %v1897, %v1896
    %v1904 = vpack.c.bf16 %v1899, %v1898
    %v1905 = vpack.c.bf16 %v1901, %v1900
    %v1906 = vld [vmem:[#allocation14] sm:$0xf]
    %v1907 = vld [vmem:[#allocation14 + $0x4] sm:$0xf]
    %v1908 = vld [vmem:[#allocation14 + $0x8] sm:$0xf]
    %v1909 = vld [vmem:[#allocation14 + $0xc] sm:$0xf]
    %v1910 = vld [vmem:[#allocation14 + $0x10] sm:$0xf]
    %v1911 = vld [vmem:[#allocation14 + $0x14] sm:$0xf]
    %v1912 = vld [vmem:[#allocation14 + $0x18] sm:$0xf]
    %v1913 = vld [vmem:[#allocation14 + $0x1c] sm:$0xf]
    %v1914 = vld [vmem:[#allocation14 + $0x20] sm:$0xf]
    %v1915 = vld [vmem:[#allocation14 + $0x24] sm:$0xf]
    %v1916 = vld [vmem:[#allocation14 + $0x28] sm:$0xf]
    %v1917 = vld [vmem:[#allocation14 + $0x2c] sm:$0xf]
    %v1918 = vld [vmem:[#allocation14 + $0x30] sm:$0xf]
    %v1919 = vld [vmem:[#allocation14 + $0x34] sm:$0xf]
    %v1920 = vld [vmem:[#allocation14 + $0x38] sm:$0xf]
    %v1921 = vld [vmem:[#allocation14 + $0x3c] sm:$0xf]
    %v1922 = vld [vmem:[%s5] sm:$0x1]
    %v1924 = vperm.slane %v1922, 0
    %v1942 = vunpack.c.l.b16 %v1906
    %v1943 = vunpack.c.l.b16 %v1907
    %v1944 = vunpack.c.l.b16 %v1908
    %v1945 = vunpack.c.l.b16 %v1909
    %v1946 = vunpack.c.l.b16 %v1910
    %v1947 = vunpack.c.l.b16 %v1911
    %v1948 = vunpack.c.l.b16 %v1912
    %v1949 = vunpack.c.l.b16 %v1913
    %v1950 = vunpack.c.l.b16 %v1914
    %v1951 = vunpack.c.l.b16 %v1915
    %v1952 = vunpack.c.l.b16 %v1916
    %v1953 = vunpack.c.l.b16 %v1917
    %v1954 = vunpack.c.l.b16 %v1918
    %v1955 = vunpack.c.l.b16 %v1919
    %v1956 = vunpack.c.l.b16 %v1920
    %v1957 = vunpack.c.l.b16 %v1921
    %v1958 = vpack.c.b16 %v1943, %v1942
    %v1959 = vpack.c.b16 %v1945, %v1944
    %v1960 = vpack.c.b16 %v1947, %v1946
    %v1961 = vpack.c.b16 %v1949, %v1948
    %v1962 = vpack.c.b16 %v1951, %v1950
    %v1963 = vpack.c.b16 %v1953, %v1952
    %v1964 = vpack.c.b16 %v1955, %v1954
    %v1965 = vpack.c.b16 %v1957, %v1956
    %1974 = vmatpush.bf16.msra.mxu0 %v1965
    %1975 = vmatpush.bf16.msra.mxu0 %v1964
    %1976 = vmatpush.bf16.msra.mxu0 %v1963
    %1977 = vmatpush.bf16.msra.mxu0 %v1962
    %1978 = vmatpush.bf16.msra.mxu0 %v1961
    %1979 = vmatpush.bf16.msra.mxu0 %v1960
    %1980 = vmatpush.bf16.msra.mxu0 %v1959
    %1981 = vmatpush.bf16.msra.mxu0 %v1958
    %1982 = vmatmul.bf16.gmra.mxu0 %v1902
    %v1983 = vpop.f32.mrf.mxu0
    %v1984 = vadd.f32 %v1924, %v1983
    %v1985 = vpop.f32.mrf.mxu0
    %v1986 = vadd.f32 %v1924, %v1985
    %1987 = vmatmul.bf16.gmra.mxu0 %v1903
    %v1988 = vpop.f32.mrf.mxu0
    %v1989 = vadd.f32 %v1924, %v1988
    %v1990 = vpop.f32.mrf.mxu0
    %v1991 = vadd.f32 %v1924, %v1990
    %1992 = vmatmul.bf16.gmra.mxu0 %v1904
    %v1993 = vpop.f32.mrf.mxu0
    %v1994 = vadd.f32 %v1924, %v1993
    %v1995 = vpop.f32.mrf.mxu0
    %v1996 = vadd.f32 %v1924, %v1995
    %1997 = vmatmul.bf16.gmra.mxu0 %v1905
    %v1998 = vpop.f32.mrf.mxu0
    %v1999 = vadd.f32 %v1924, %v1998
    %v2000 = vpop.f32.mrf.mxu0
    %v2001 = vadd.f32 %v1924, %v2000
    %2002 = vdwg.mxu0
    %2003 = vst [vmem:[#allocation18] sm:$0xff] %v1984
    %2004 = vst [vmem:[#allocation18 + $0x8] sm:$0xff] %v1986
    %2005 = vst [vmem:[#allocation18 + $0x10] sm:$0xff] %v1989
    %2006 = vst [vmem:[#allocation18 + $0x18] sm:$0xff] %v1991
    %2007 = vst [vmem:[#allocation18 + $0x20] sm:$0xff] %v1994
    %2008 = vst [vmem:[#allocation18 + $0x28] sm:$0xff] %v1996
    %2009 = vst [vmem:[#allocation18 + $0x30] sm:$0xff] %v1999
    %2010 = vst [vmem:[#allocation18 + $0x38] sm:$0xff] %v2001
    // Predicated region
    $region70: #{tpu_custom_call.1} parent=1 // pred_check
      _
    $region71: #{tpu_custom_call.1} parent=1 // pred_check_branch
      %2012 = sbr.rel (0) target = $region73
    $region72: #{tpu_custom_call.1} parent=1 // pred_region
      %2014 = vsyncadd [#allocation8], 0
      %s2015 = sshll.u32 [#allocation18], 4
      %s2016 = int_to_ptr.vmem [resolvable:$true] %s2015
      %s2017 = sshll.u32 %s8, 4
      %s2018 = int_to_ptr.hbm [resolvable:$true] %s2017
      %2023 = dma.vmem_to_hbm [thread:$0]  %s2016, 1024, %s2018, [#allocation8], 128, 128, 8
    $region73: #{tpu_custom_call.1} parent=1 // pred_fallthru
      _
    // Predicated region
    $region74: #{tpu_custom_call.1} parent=1 // pred_check
      _
    $region75: #{tpu_custom_call.1} parent=1 // pred_check_branch
      %2025 = sbr.rel (0) target = $region77
    $region76: #{tpu_custom_call.1} parent=1 // pred_region
      %2027 = vsyncadd [#allocation20], 0
      %s2029 = sshll.u32 [#allocation19], 4
      %s2030 = int_to_ptr.vmem [resolvable:$true] %s2029
      %s2031 = sshll.u32 %s9, 4
      %s2032 = int_to_ptr.hbm [resolvable:$true] %s2031
      %2034 = dma.vmem_to_hbm [thread:$0]  %s2030, 128, %s2032, [#allocation20]
    $region77: #{tpu_custom_call.1} parent=1 // pred_fallthru
      _
    // Predicated region
    $region78: #{tpu_custom_call.1} parent=1 // pred_check
      _
    $region79: #{tpu_custom_call.1} parent=1 // pred_check_branch
      %2036 = sbr.rel (0) target = $region81
    $region80: #{tpu_custom_call.1} parent=1 // pred_region
      %2038 = vsyncadd [#allocation20], 0
      %s2040 = sshll.u32 [#allocation21], 4
      %s2041 = int_to_ptr.vmem [resolvable:$true] %s2040
      %s2042 = sshll.u32 %s10, 4
      %s2043 = int_to_ptr.hbm [resolvable:$true] %s2042
      %2045 = dma.vmem_to_hbm [thread:$0]  %s2041, 128, %s2043, [#allocation20]
    $region81: #{tpu_custom_call.1} parent=1 // pred_fallthru
      _
    // Predicated region
    $region82: #{tpu_custom_call.1} parent=1 // pred_check
      _
    $region83: #{tpu_custom_call.1} parent=1 // pred_check_branch
      %2047 = sbr.rel (0) target = $region85
    $region84: #{tpu_custom_call.1} parent=1 // pred_region
      %2049 = dma.done [#allocation8], 1024
    $region85: #{tpu_custom_call.1} parent=1 // pred_fallthru
      _
    // Predicated region
    $region86: #{tpu_custom_call.1} parent=1 // pred_check
      _
    $region87: #{tpu_custom_call.1} parent=1 // pred_check_branch
      %2051 = sbr.rel (0) target = $region89
    $region88: #{tpu_custom_call.1} parent=1 // pred_region
      %2053 = dma.done [#allocation20], 128
    $region89: #{tpu_custom_call.1} parent=1 // pred_fallthru
      _
    // Predicated region
    $region90: #{tpu_custom_call.1} parent=1 // pred_check
      _
    $region91: #{tpu_custom_call.1} parent=1 // pred_check_branch
      %2055 = sbr.rel (0) target = $region93
    $region92: #{tpu_custom_call.1} parent=1 // pred_region
      %2057 = dma.done [#allocation20], 128
    $region93: #{tpu_custom_call.1} parent=1 // pred_fallthru
      _
    %2058 = vsyncpa [#allocation7], 1
    %2059 = vsyncpa [#allocation10], 1
    %2060 = vsyncpa [#allocation13], 1
    %2061 = vsyncpa [#allocation16], 1
    %2062 = vsyncpa [#allocation8], 1
    %2063 = vsyncpa [#allocation20], 1

</llo_original>
